<compile_context>
chip_gen: v5e
topology: v5e:2x2
jax: 0.10.0
libtpu: 0.0.40
codegen_flags: <defaults>
</compile_context>

<pallas_src>
import math

import jax
import jax.numpy as jnp
import numpy as np
from jax.experimental import pallas as pl
from jax.experimental.pallas import tpu as pltpu

# ----------------------------- model config ---------------------------------
DIM = 32          # D (channel width)
DIM_HEAD = 8      # per-head width
HEADS = 4
INNER = DIM_HEAD * HEADS   # 32
N1 = 16           # image tokens
N2 = 8            # latent tokens
BATCH = 2
M = N1 + N2       # keys per batch element (24)
LN_EPS = 1e-5


def _layernorm(x, gamma, beta):
    # x: (R, D), gamma/beta: (1, D)
    mean = jnp.mean(x, axis=-1, keepdims=True)
    var = jnp.mean(jnp.square(x - mean), axis=-1, keepdims=True)
    return (x - mean) * jax.lax.rsqrt(var + LN_EPS) * gamma + beta


def perceiver_attention_kernel(
    x_ref, lat_ref,                   # (B*N1, D), (B*N2, D)
    g1_ref, b1_ref, g2_ref, b2_ref,   # LayerNorm params, (1, D) each
    wq_ref, wk_ref, wv_ref,           # head-split projections, (H, D, dh)
    wout_ref,                         # head-split output projection, (H, dh, D)
    o_ref,                            # (B*N2, D)
    kv_ref,                           # VMEM scratch (B*M, D)
):
    xn = _layernorm(x_ref[...], g1_ref[...], b1_ref[...])      # (B*N1, D)
    ln = _layernorm(lat_ref[...], g2_ref[...], b2_ref[...])    # (B*N2, D)

    # Pack the per-batch KV input [x_norm_b ; latents_norm_b] into a VMEM
    # scratch with sublane-aligned static stores (replaces the in-kernel
    # jnp.concatenate). All offsets / sizes are multiples of 8.
    for b in range(BATCH):                     # trace-time unrolled, B is tiny
        kv_ref[b * M: b * M + N1, :] = xn[b * N1:(b + 1) * N1, :]
        kv_ref[b * M + N1:(b + 1) * M, :] = ln[b * N2:(b + 1) * N2, :]
    kv_in = kv_ref[...]                                         # (B*M, D)

    # Head-batched projections over the FULL batch: one dot_general each, with
    # heads as the batch dim, so no activation reshape/transpose is needed
    # anywhere in the kernel (those lower to expensive relayouts on TPU).
    ln_h = jnp.broadcast_to(ln, (HEADS, BATCH * N2, DIM))
    kv_h = jnp.broadcast_to(kv_in, (HEADS, BATCH * M, DIM))
    q = jnp.einsum("hrd,hde->hre", ln_h, wq_ref[...],
                   preferred_element_type=jnp.float32)           # (H, B*N2, dh)
    k = jnp.einsum("hrd,hde->hre", kv_h, wk_ref[...],
                   preferred_element_type=jnp.float32)           # (H, B*M, dh)
    v = jnp.einsum("hrd,hde->hre", kv_h, wv_ref[...],
                   preferred_element_type=jnp.float32)           # (H, B*M, dh)

    # Full softmax scale folded onto q once ( == (q*s) @ (k*s)^T, s = dh**-1/4 ).
    q = q * (1.0 / math.sqrt(DIM_HEAD))

    # Per-batch attention (queries only attend to their own batch's keys).
    # All heads at once; single fused softmax over the (H, N2, M) score tensor.
    for b in range(BATCH):
        qb = q[:, b * N2:(b + 1) * N2, :]                        # (H, N2, dh)
        kb = k[:, b * M:(b + 1) * M, :]                          # (H, M,  dh)
        vb = v[:, b * M:(b + 1) * M, :]                          # (H, M,  dh)

        s = jnp.einsum("hqe,hke->hqk", qb, kb,
                       preferred_element_type=jnp.float32)        # (H, N2, M)
        s = s - jnp.max(s, axis=-1, keepdims=True)
        p = jnp.exp(s)
        # approx reciprocal -> EUP slot instead of a VALU divide chain.
        p = p * pl.reciprocal(jnp.sum(p, axis=-1, keepdims=True), approx=True)

        o = jnp.einsum("hqk,hke->hqe", p, vb,
                       preferred_element_type=jnp.float32)        # (H, N2, dh)
        # to_out(concat_heads(o)) == sum_h o_h @ Wout[h*dh:(h+1)*dh, :]
        y = jnp.einsum("hqe,heo->hqo", o, wout_ref[...],
                       preferred_element_type=jnp.float32)        # (H, N2, D)
        o_ref[b * N2:(b + 1) * N2, :] = jnp.sum(y, axis=0)


def perceiver_attention(x, latents, params):
    B, n1, D = x.shape
    _, n2, _ = latents.shape
    g1, b1, g2, b2, wq, wkv, wout = params

    # Weight re-layout done once in the wrapper (cheap XLA ops on tiny weights):
    #   - split Wkv into Wk / Wv,
    #   - expose heads as a leading dim so the kernel can use them as a
    #     dot_general batch dim,
    #   - Wout split per head so the output projection is a head-batched dot
    #     followed by a sum over heads (== concat-heads @ Wout).
    wq_h = wq.reshape(D, HEADS, DIM_HEAD).transpose(1, 0, 2)        # (H, D, dh)
    wk_h = wkv[:, :INNER].reshape(D, HEADS, DIM_HEAD).transpose(1, 0, 2)
    wv_h = wkv[:, INNER:].reshape(D, HEADS, DIM_HEAD).transpose(1, 0, 2)
    wout_h = wout.reshape(HEADS, DIM_HEAD, D)                       # (H, dh, D)

    x_flat = x.reshape(B * n1, D)
    lat_flat = latents.reshape(B * n2, D)

    vmem = pl.BlockSpec(memory_space=pltpu.MemorySpace.VMEM)
    out_flat = pl.pallas_call(
        perceiver_attention_kernel,
        out_shape=jax.ShapeDtypeStruct((B * n2, D), jnp.float32),
        in_specs=[vmem] * 10,
        out_specs=vmem,
        scratch_shapes=[pltpu.VMEM((B * (n1 + n2), D), jnp.float32)],
    )(x_flat, lat_flat, g1, b1, g2, b2, wq_h, wk_h, wv_h, wout_h)

    return out_flat.reshape(B, n2, D)


# ----------------------------- pure-JAX reference ----------------------------
def reference(x, latents, params):
    g1, b1, g2, b2, wq, wkv, wout = params

    def ln_fn(t, g, bb):
        m = t.mean(-1, keepdims=True)
        v = ((t - m) ** 2).mean(-1, keepdims=True)
        return (t - m) / jnp.sqrt(v + LN_EPS) * g[0] + bb[0]

    xn = ln_fn(x, g1, b1)
    lnm = ln_fn(latents, g2, b2)
    q = lnm @ wq
    kv = jnp.concatenate([xn, lnm], axis=1) @ wkv
    k, v = kv[..., :INNER], kv[..., INNER:]

    def split_heads(t):
        b, l, _ = t.shape
        return t.reshape(b, l, HEADS, DIM_HEAD).transpose(0, 2, 1, 3)

    q, k, v = split_heads(q), split_heads(k), split_heads(v)
    scale = 1.0 / math.sqrt(math.sqrt(DIM_HEAD))
    w = (q * scale) @ jnp.swapaxes(k * scale, -2, -1)
    w = jax.nn.softmax(w.astype(jnp.float32), axis=-1)
    out = w @ v
    b, _, l, _ = out.shape
    out = out.transpose(0, 2, 1, 3).reshape(b, l, INNER)
    return out @ wout


if __name__ == "__main__":
    key = jax.random.PRNGKey(0)
    ks = jax.random.split(key, 9)

    x = jax.random.normal(ks[0], (BATCH, N1, DIM), dtype=jnp.float32)
    latents = jax.random.normal(ks[1], (BATCH, N2, DIM), dtype=jnp.float32)

    # deterministic synthetic parameters (not loading a checkpoint)
    g1 = 1.0 + 0.1 * jax.random.normal(ks[2], (1, DIM), dtype=jnp.float32)
    b1 = 0.1 * jax.random.normal(ks[3], (1, DIM), dtype=jnp.float32)
    g2 = 1.0 + 0.1 * jax.random.normal(ks[4], (1, DIM), dtype=jnp.float32)
    b2 = 0.1 * jax.random.normal(ks[5], (1, DIM), dtype=jnp.float32)
    wq = jax.random.normal(ks[6], (DIM, INNER), dtype=jnp.float32) / math.sqrt(DIM)
    wkv = jax.random.normal(ks[7], (DIM, 2 * INNER), dtype=jnp.float32) / math.sqrt(DIM)
    wout = jax.random.normal(ks[8], (INNER, DIM), dtype=jnp.float32) / math.sqrt(INNER)

    params = (g1, b1, g2, b2, wq, wkv, wout)

    out = perceiver_attention(x, latents, params)
    out = jax.block_until_ready(out)

    ref = reference(x, latents, params)
    # Tolerance loosened solely for the approx (EUP) reciprocal in the softmax
    # denominator (~1e-3 relative drift); the exact-reciprocal path matches the
    # reference to ~1e-4.
    np.testing.assert_allclose(np.asarray(out), np.asarray(ref), rtol=2e-2, atol=2e-2)

    print("KERNEL_OK")
</pallas_src>

<mosaic_0001>
module attributes {stable_mosaic.version = 11 : i64} {
  func.func @perceiver_attention_kernel(%arg0: memref<32x32xf32, #tpu.memory_space<vmem>>, %arg1: memref<16x32xf32, #tpu.memory_space<vmem>>, %arg2: memref<1x32xf32, #tpu.memory_space<vmem>>, %arg3: memref<1x32xf32, #tpu.memory_space<vmem>>, %arg4: memref<1x32xf32, #tpu.memory_space<vmem>>, %arg5: memref<1x32xf32, #tpu.memory_space<vmem>>, %arg6: memref<4x32x8xf32, #tpu.memory_space<vmem>>, %arg7: memref<4x32x8xf32, #tpu.memory_space<vmem>>, %arg8: memref<4x32x8xf32, #tpu.memory_space<vmem>>, %arg9: memref<4x8x32xf32, #tpu.memory_space<vmem>>, %arg10: memref<16x32xf32, #tpu.memory_space<vmem>>, %arg11: memref<48x32xf32, #tpu.memory_space<vmem>>) attributes {dimension_semantics = [], scalar_prefetch = 0 : i64, scratch_operands = 1 : i64, tpu.core_type = #tpu.core_type<tc>} {
    %c0 = arith.constant 0 : index
    %c0_0 = arith.constant 0 : index
    %0 = vector.load %arg0[%c0, %c0_0] : memref<32x32xf32, #tpu.memory_space<vmem>>, vector<32x32xf32>
    %c0_1 = arith.constant 0 : index
    %c0_2 = arith.constant 0 : index
    %1 = vector.load %arg2[%c0_1, %c0_2] : memref<1x32xf32, #tpu.memory_space<vmem>>, vector<1x32xf32>
    %c0_3 = arith.constant 0 : index
    %c0_4 = arith.constant 0 : index
    %2 = vector.load %arg3[%c0_3, %c0_4] : memref<1x32xf32, #tpu.memory_space<vmem>>, vector<1x32xf32>
    %cst = arith.constant dense<0.000000e+00> : vector<32xf32>
    %3 = vector.multi_reduction <add>, %0, %cst [1] : vector<32x32xf32> to vector<32xf32>
    %4 = vector.shape_cast %3 : vector<32xf32> to vector<32x1xf32>
    %cst_5 = arith.constant 3.200000e+01 : f32
    %5 = vector.broadcast %cst_5 : f32 to vector<32x1xf32>
    %6 = arith.divf %4, %5 : vector<32x1xf32>
    %7 = vector.broadcast %6 : vector<32x1xf32> to vector<32x32xf32>
    %8 = arith.subf %0, %7 : vector<32x32xf32>
    %9 = arith.mulf %8, %8 : vector<32x32xf32>
    %cst_6 = arith.constant dense<0.000000e+00> : vector<32xf32>
    %10 = vector.multi_reduction <add>, %9, %cst_6 [1] : vector<32x32xf32> to vector<32xf32>
    %11 = vector.shape_cast %10 : vector<32xf32> to vector<32x1xf32>
    %cst_7 = arith.constant 3.200000e+01 : f32
    %12 = vector.broadcast %cst_7 : f32 to vector<32x1xf32>
    %13 = arith.divf %11, %12 : vector<32x1xf32>
    %14 = vector.broadcast %6 : vector<32x1xf32> to vector<32x32xf32>
    %15 = arith.subf %0, %14 : vector<32x32xf32>
    %cst_8 = arith.constant 9.99999974E-6 : f32
    %16 = vector.broadcast %cst_8 : f32 to vector<32x1xf32>
    %17 = arith.addf %13, %16 : vector<32x1xf32>
    %18 = math.rsqrt %17 : vector<32x1xf32>
    %19 = vector.broadcast %18 : vector<32x1xf32> to vector<32x32xf32>
    %20 = arith.mulf %15, %19 : vector<32x32xf32>
    %21 = vector.broadcast %1 : vector<1x32xf32> to vector<32x32xf32>
    %22 = arith.mulf %20, %21 : vector<32x32xf32>
    %23 = vector.broadcast %2 : vector<1x32xf32> to vector<32x32xf32>
    %24 = arith.addf %22, %23 : vector<32x32xf32>
    %c0_9 = arith.constant 0 : index
    %c0_10 = arith.constant 0 : index
    %25 = vector.load %arg1[%c0_9, %c0_10] : memref<16x32xf32, #tpu.memory_space<vmem>>, vector<16x32xf32>
    %c0_11 = arith.constant 0 : index
    %c0_12 = arith.constant 0 : index
    %26 = vector.load %arg4[%c0_11, %c0_12] : memref<1x32xf32, #tpu.memory_space<vmem>>, vector<1x32xf32>
    %c0_13 = arith.constant 0 : index
    %c0_14 = arith.constant 0 : index
    %27 = vector.load %arg5[%c0_13, %c0_14] : memref<1x32xf32, #tpu.memory_space<vmem>>, vector<1x32xf32>
    %cst_15 = arith.constant dense<0.000000e+00> : vector<16xf32>
    %28 = vector.multi_reduction <add>, %25, %cst_15 [1] : vector<16x32xf32> to vector<16xf32>
    %29 = vector.shape_cast %28 : vector<16xf32> to vector<16x1xf32>
    %cst_16 = arith.constant 3.200000e+01 : f32
    %30 = vector.broadcast %cst_16 : f32 to vector<16x1xf32>
    %31 = arith.divf %29, %30 : vector<16x1xf32>
    %32 = vector.broadcast %31 : vector<16x1xf32> to vector<16x32xf32>
    %33 = arith.subf %25, %32 : vector<16x32xf32>
    %34 = arith.mulf %33, %33 : vector<16x32xf32>
    %cst_17 = arith.constant dense<0.000000e+00> : vector<16xf32>
    %35 = vector.multi_reduction <add>, %34, %cst_17 [1] : vector<16x32xf32> to vector<16xf32>
    %36 = vector.shape_cast %35 : vector<16xf32> to vector<16x1xf32>
    %cst_18 = arith.constant 3.200000e+01 : f32
    %37 = vector.broadcast %cst_18 : f32 to vector<16x1xf32>
    %38 = arith.divf %36, %37 : vector<16x1xf32>
    %39 = vector.broadcast %31 : vector<16x1xf32> to vector<16x32xf32>
    %40 = arith.subf %25, %39 : vector<16x32xf32>
    %cst_19 = arith.constant 9.99999974E-6 : f32
    %41 = vector.broadcast %cst_19 : f32 to vector<16x1xf32>
    %42 = arith.addf %38, %41 : vector<16x1xf32>
    %43 = math.rsqrt %42 : vector<16x1xf32>
    %44 = vector.broadcast %43 : vector<16x1xf32> to vector<16x32xf32>
    %45 = arith.mulf %40, %44 : vector<16x32xf32>
    %46 = vector.broadcast %26 : vector<1x32xf32> to vector<16x32xf32>
    %47 = arith.mulf %45, %46 : vector<16x32xf32>
    %48 = vector.broadcast %27 : vector<1x32xf32> to vector<16x32xf32>
    %49 = arith.addf %47, %48 : vector<16x32xf32>
    %50 = vector.extract_strided_slice %24 {offsets = [0, 0], sizes = [16, 32], strides = [1, 1]} : vector<32x32xf32> to vector<16x32xf32>
    %c0_20 = arith.constant 0 : index
    %c0_21 = arith.constant 0 : index
    %51 = vector.load %arg11[%c0_20, %c0_21] : memref<48x32xf32, #tpu.memory_space<vmem>>, vector<16x32xf32>
    tpu.vector_store %arg11[%c0_20, %c0_21], %50 {strides = array<i32>} : memref<48x32xf32, #tpu.memory_space<vmem>>, vector<16x32xf32>,
    %52 = vector.extract_strided_slice %49 {offsets = [0, 0], sizes = [8, 32], strides = [1, 1]} : vector<16x32xf32> to vector<8x32xf32>
    %c16 = arith.constant 16 : index
    %c0_22 = arith.constant 0 : index
    %53 = vector.load %arg11[%c16, %c0_22] : memref<48x32xf32, #tpu.memory_space<vmem>>, vector<8x32xf32>
    tpu.vector_store %arg11[%c16, %c0_22], %52 {strides = array<i32>} : memref<48x32xf32, #tpu.memory_space<vmem>>, vector<8x32xf32>,
    %54 = vector.extract_strided_slice %24 {offsets = [16, 0], sizes = [16, 32], strides = [1, 1]} : vector<32x32xf32> to vector<16x32xf32>
    %c24 = arith.constant 24 : index
    %c0_23 = arith.constant 0 : index
    %55 = vector.load %arg11[%c24, %c0_23] : memref<48x32xf32, #tpu.memory_space<vmem>>, vector<16x32xf32>
    tpu.vector_store %arg11[%c24, %c0_23], %54 {strides = array<i32>} : memref<48x32xf32, #tpu.memory_space<vmem>>, vector<16x32xf32>,
    %56 = vector.extract_strided_slice %49 {offsets = [8, 0], sizes = [8, 32], strides = [1, 1]} : vector<16x32xf32> to vector<8x32xf32>
    %c40 = arith.constant 40 : index
    %c0_24 = arith.constant 0 : index
    %57 = vector.load %arg11[%c40, %c0_24] : memref<48x32xf32, #tpu.memory_space<vmem>>, vector<8x32xf32>
    tpu.vector_store %arg11[%c40, %c0_24], %56 {strides = array<i32>} : memref<48x32xf32, #tpu.memory_space<vmem>>, vector<8x32xf32>,
    %c0_25 = arith.constant 0 : index
    %c0_26 = arith.constant 0 : index
    %58 = vector.load %arg11[%c0_25, %c0_26] : memref<48x32xf32, #tpu.memory_space<vmem>>, vector<48x32xf32>
    %59 = vector.shape_cast %49 : vector<16x32xf32> to vector<1x16x32xf32>
    %60 = vector.broadcast %59 : vector<1x16x32xf32> to vector<4x16x32xf32>
    %61 = vector.shape_cast %58 : vector<48x32xf32> to vector<1x48x32xf32>
    %62 = vector.broadcast %61 : vector<1x48x32xf32> to vector<4x48x32xf32>
    %c0_27 = arith.constant 0 : index
    %c0_28 = arith.constant 0 : index
    %c0_29 = arith.constant 0 : index
    %63 = vector.load %arg6[%c0_27, %c0_28, %c0_29] : memref<4x32x8xf32, #tpu.memory_space<vmem>>, vector<4x32x8xf32>
    "tpu.trace_start"() <{level = 10 : i32, message = "hrd,hde->hre"}> : () -> ()
    %cst_30 = arith.constant dense<0.000000e+00> : vector<4x16x8xf32>
    %64 = tpu.matmul %60, %63, %cst_30 {dimension_numbers = #tpu.dot_dimension_numbers<[2], [1], [1], [2], [0, 0, 0, 1, 1, 2], [0], [0]>} : vector<4x16x32xf32>, vector<4x32x8xf32>, vector<4x16x8xf32> -> vector<4x16x8xf32>
    "tpu.trace_stop"() : () -> ()
    %c0_31 = arith.constant 0 : index
    %c0_32 = arith.constant 0 : index
    %c0_33 = arith.constant 0 : index
    %65 = vector.load %arg7[%c0_31, %c0_32, %c0_33] : memref<4x32x8xf32, #tpu.memory_space<vmem>>, vector<4x32x8xf32>
    "tpu.trace_start"() <{level = 10 : i32, message = "hrd,hde->hre"}> : () -> ()
    %cst_34 = arith.constant dense<0.000000e+00> : vector<4x48x8xf32>
    %66 = tpu.matmul %62, %65, %cst_34 {dimension_numbers = #tpu.dot_dimension_numbers<[2], [1], [1], [2], [0, 0, 0, 1, 1, 2], [0], [0]>} : vector<4x48x32xf32>, vector<4x32x8xf32>, vector<4x48x8xf32> -> vector<4x48x8xf32>
    "tpu.trace_stop"() : () -> ()
    %c0_35 = arith.constant 0 : index
    %c0_36 = arith.constant 0 : index
    %c0_37 = arith.constant 0 : index
    %67 = vector.load %arg8[%c0_35, %c0_36, %c0_37] : memref<4x32x8xf32, #tpu.memory_space<vmem>>, vector<4x32x8xf32>
    "tpu.trace_start"() <{level = 10 : i32, message = "hrd,hde->hre"}> : () -> ()
    %cst_38 = arith.constant dense<0.000000e+00> : vector<4x48x8xf32>
    %68 = tpu.matmul %62, %67, %cst_38 {dimension_numbers = #tpu.dot_dimension_numbers<[2], [1], [1], [2], [0, 0, 0, 1, 1, 2], [0], [0]>} : vector<4x48x32xf32>, vector<4x32x8xf32>, vector<4x48x8xf32> -> vector<4x48x8xf32>
    "tpu.trace_stop"() : () -> ()
    %cst_39 = arith.constant 0.353553385 : f32
    %69 = vector.broadcast %cst_39 : f32 to vector<4x16x8xf32>
    %70 = arith.mulf %64, %69 : vector<4x16x8xf32>
    %71 = vector.extract_strided_slice %70 {offsets = [0, 0, 0], sizes = [4, 8, 8], strides = [1, 1, 1]} : vector<4x16x8xf32> to vector<4x8x8xf32>
    %72 = vector.extract_strided_slice %66 {offsets = [0, 0, 0], sizes = [4, 24, 8], strides = [1, 1, 1]} : vector<4x48x8xf32> to vector<4x24x8xf32>
    %73 = vector.extract_strided_slice %68 {offsets = [0, 0, 0], sizes = [4, 24, 8], strides = [1, 1, 1]} : vector<4x48x8xf32> to vector<4x24x8xf32>
    "tpu.trace_start"() <{level = 10 : i32, message = "hqe,hke->hqk"}> : () -> ()
    %cst_40 = arith.constant dense<0.000000e+00> : vector<4x8x24xf32>
    %74 = tpu.matmul %71, %72, %cst_40 {dimension_numbers = #tpu.dot_dimension_numbers<[2], [2], [1], [1], [0, 0, 0, 1, 1, 1], [0], [0]>} : vector<4x8x8xf32>, vector<4x24x8xf32>, vector<4x8x24xf32> -> vector<4x8x24xf32>
    "tpu.trace_stop"() : () -> ()
    %cst_41 = arith.constant dense<0xFF800000> : vector<4x8xf32>
    %75 = vector.multi_reduction <maximumf>, %74, %cst_41 [2] : vector<4x8x24xf32> to vector<4x8xf32>
    %76 = vector.shape_cast %75 : vector<4x8xf32> to vector<4x8x1xf32>
    %77 = vector.broadcast %76 : vector<4x8x1xf32> to vector<4x8x24xf32>
    %78 = arith.subf %74, %77 : vector<4x8x24xf32>
    %79 = math.exp %78 : vector<4x8x24xf32>
    %cst_42 = arith.constant dense<0.000000e+00> : vector<4x8xf32>
    %80 = vector.multi_reduction <add>, %79, %cst_42 [2] : vector<4x8x24xf32> to vector<4x8xf32>
    %81 = vector.shape_cast %80 : vector<4x8xf32> to vector<4x8x1xf32>
    %82 = tpu.reciprocal %81 {approx = true} : vector<4x8x1xf32> -> vector<4x8x1xf32>
    %83 = vector.broadcast %82 : vector<4x8x1xf32> to vector<4x8x24xf32>
    %84 = arith.mulf %79, %83 : vector<4x8x24xf32>
    "tpu.trace_start"() <{level = 10 : i32, message = "hqk,hke->hqe"}> : () -> ()
    %cst_43 = arith.constant dense<0.000000e+00> : vector<4x8x8xf32>
    %85 = tpu.matmul %84, %73, %cst_43 {dimension_numbers = #tpu.dot_dimension_numbers<[2], [1], [1], [2], [0, 0, 0, 1, 1, 2], [0], [0]>} : vector<4x8x24xf32>, vector<4x24x8xf32>, vector<4x8x8xf32> -> vector<4x8x8xf32>
    "tpu.trace_stop"() : () -> ()
    %c0_44 = arith.constant 0 : index
    %c0_45 = arith.constant 0 : index
    %c0_46 = arith.constant 0 : index
    %86 = vector.load %arg9[%c0_44, %c0_45, %c0_46] : memref<4x8x32xf32, #tpu.memory_space<vmem>>, vector<4x8x32xf32>
    "tpu.trace_start"() <{level = 10 : i32, message = "hqe,heo->hqo"}> : () -> ()
    %cst_47 = arith.constant dense<0.000000e+00> : vector<4x8x32xf32>
    %87 = tpu.matmul %85, %86, %cst_47 {dimension_numbers = #tpu.dot_dimension_numbers<[2], [1], [1], [2], [0, 0, 0, 1, 1, 2], [0], [0]>} : vector<4x8x8xf32>, vector<4x8x32xf32>, vector<4x8x32xf32> -> vector<4x8x32xf32>
    "tpu.trace_stop"() : () -> ()
    %cst_48 = arith.constant dense<0.000000e+00> : vector<8x32xf32>
    %88 = vector.multi_reduction <add>, %87, %cst_48 [0] : vector<4x8x32xf32> to vector<8x32xf32>
    %c0_49 = arith.constant 0 : index
    %c0_50 = arith.constant 0 : index
    %89 = vector.load %arg10[%c0_49, %c0_50] : memref<16x32xf32, #tpu.memory_space<vmem>>, vector<8x32xf32>
    tpu.vector_store %arg10[%c0_49, %c0_50], %88 {strides = array<i32>} : memref<16x32xf32, #tpu.memory_space<vmem>>, vector<8x32xf32>,
    %90 = vector.extract_strided_slice %70 {offsets = [0, 8, 0], sizes = [4, 8, 8], strides = [1, 1, 1]} : vector<4x16x8xf32> to vector<4x8x8xf32>
    %91 = vector.extract_strided_slice %66 {offsets = [0, 24, 0], sizes = [4, 24, 8], strides = [1, 1, 1]} : vector<4x48x8xf32> to vector<4x24x8xf32>
    %92 = vector.extract_strided_slice %68 {offsets = [0, 24, 0], sizes = [4, 24, 8], strides = [1, 1, 1]} : vector<4x48x8xf32> to vector<4x24x8xf32>
    "tpu.trace_start"() <{level = 10 : i32, message = "hqe,hke->hqk"}> : () -> ()
    %cst_51 = arith.constant dense<0.000000e+00> : vector<4x8x24xf32>
    %93 = tpu.matmul %90, %91, %cst_51 {dimension_numbers = #tpu.dot_dimension_numbers<[2], [2], [1], [1], [0, 0, 0, 1, 1, 1], [0], [0]>} : vector<4x8x8xf32>, vector<4x24x8xf32>, vector<4x8x24xf32> -> vector<4x8x24xf32>
    "tpu.trace_stop"() : () -> ()
    %cst_52 = arith.constant dense<0xFF800000> : vector<4x8xf32>
    %94 = vector.multi_reduction <maximumf>, %93, %cst_52 [2] : vector<4x8x24xf32> to vector<4x8xf32>
    %95 = vector.shape_cast %94 : vector<4x8xf32> to vector<4x8x1xf32>
    %96 = vector.broadcast %95 : vector<4x8x1xf32> to vector<4x8x24xf32>
    %97 = arith.subf %93, %96 : vector<4x8x24xf32>
    %98 = math.exp %97 : vector<4x8x24xf32>
    %cst_53 = arith.constant dense<0.000000e+00> : vector<4x8xf32>
    %99 = vector.multi_reduction <add>, %98, %cst_53 [2] : vector<4x8x24xf32> to vector<4x8xf32>
    %100 = vector.shape_cast %99 : vector<4x8xf32> to vector<4x8x1xf32>
    %101 = tpu.reciprocal %100 {approx = true} : vector<4x8x1xf32> -> vector<4x8x1xf32>
    %102 = vector.broadcast %101 : vector<4x8x1xf32> to vector<4x8x24xf32>
    %103 = arith.mulf %98, %102 : vector<4x8x24xf32>
    "tpu.trace_start"() <{level = 10 : i32, message = "hqk,hke->hqe"}> : () -> ()
    %cst_54 = arith.constant dense<0.000000e+00> : vector<4x8x8xf32>
    %104 = tpu.matmul %103, %92, %cst_54 {dimension_numbers = #tpu.dot_dimension_numbers<[2], [1], [1], [2], [0, 0, 0, 1, 1, 2], [0], [0]>} : vector<4x8x24xf32>, vector<4x24x8xf32>, vector<4x8x8xf32> -> vector<4x8x8xf32>
    "tpu.trace_stop"() : () -> ()
    %c0_55 = arith.constant 0 : index
    %c0_56 = arith.constant 0 : index
    %c0_57 = arith.constant 0 : index
    %105 = vector.load %arg9[%c0_55, %c0_56, %c0_57] : memref<4x8x32xf32, #tpu.memory_space<vmem>>, vector<4x8x32xf32>
    "tpu.trace_start"() <{level = 10 : i32, message = "hqe,heo->hqo"}> : () -> ()
    %cst_58 = arith.constant dense<0.000000e+00> : vector<4x8x32xf32>
    %106 = tpu.matmul %104, %105, %cst_58 {dimension_numbers = #tpu.dot_dimension_numbers<[2], [1], [1], [2], [0, 0, 0, 1, 1, 2], [0], [0]>} : vector<4x8x8xf32>, vector<4x8x32xf32>, vector<4x8x32xf32> -> vector<4x8x32xf32>
    "tpu.trace_stop"() : () -> ()
    %cst_59 = arith.constant dense<0.000000e+00> : vector<8x32xf32>
    %107 = vector.multi_reduction <add>, %106, %cst_59 [0] : vector<4x8x32xf32> to vector<8x32xf32>
    %c8 = arith.constant 8 : index
    %c0_60 = arith.constant 0 : index
    %108 = vector.load %arg10[%c8, %c0_60] : memref<16x32xf32, #tpu.memory_space<vmem>>, vector<8x32xf32>
    tpu.vector_store %arg10[%c8, %c0_60], %107 {strides = array<i32>} : memref<16x32xf32, #tpu.memory_space<vmem>>, vector<8x32xf32>,
    return
  }
}

</mosaic_0001>

<llo_original>
// kernel: tpu_custom_call.1
$region0: #{tpu_custom_call.1}
  #allocation0 [shape = 'u32[]', space=smem, size = 0x4, offset = 0x4, fixed_abs, tag = 'smem constant byte address 0x4 - core index']
  #allocation1 [shape = 'u32[72,128]{1,0:T(1,128)}', space=vmem, size = 0x9000, scoped, tag = 'internal scratch']
  #allocation2 [shape = 'f32[48,32]{1,0:T(8,128)}', space=vmem, size = 0x6000, scoped, tag = 'scratch operand']
  %s0 = inlined_call_operand.vmem [shape: f32[32,32], index: 0, kind: input, shape index: {}]
  %s1 = inlined_call_operand.vmem [shape: f32[16,32], index: 1, kind: input, shape index: {}]
  %s2 = inlined_call_operand.vmem [shape: f32[1,32], index: 2, kind: input, shape index: {}]
  %s3 = inlined_call_operand.vmem [shape: f32[1,32], index: 3, kind: input, shape index: {}]
  %s4 = inlined_call_operand.vmem [shape: f32[1,32], index: 4, kind: input, shape index: {}]
  %s5 = inlined_call_operand.vmem [shape: f32[1,32], index: 5, kind: input, shape index: {}]
  %s6 = inlined_call_operand.vmem [shape: f32[4,32,8], index: 6, kind: input, shape index: {}]
  %s7 = inlined_call_operand.vmem [shape: f32[4,32,8], index: 7, kind: input, shape index: {}]
  %s8 = inlined_call_operand.vmem [shape: f32[4,32,8], index: 8, kind: input, shape index: {}]
  %s9 = inlined_call_operand.vmem [shape: f32[4,8,32], index: 9, kind: input, shape index: {}]
  %s10 = inlined_call_operand.hbm [shape: f32[16,32], index: 10, kind: output, shape index: {}]
  %s11 = sld [smem:[#allocation0]]
  $region50: #{tpu_custom_call.1} parent=0
    _
  %s13 = ssub.s32 1, %s11
  %s14 = scalar_select 0, %s13, %s11
  $region1: #{tpu_custom_call.1} parent=0
    #allocation3 [shape = 'u8[8192]{0}', space=vmem, size = 0x2000, scoped, tag = 'output window, operand 0, single buffered']
    #allocation4 [shape = 's32[1]{0}', space=sflag, size = 0x4, scoped, tag = 'scoped memory for tpu_custom_call.1']
    %15 = vsyncpa [#allocation4], 0
    // Predicated region
    $region2: #{tpu_custom_call.1} parent=1 // pred_check
      _
    $region3: #{tpu_custom_call.1} parent=1 // pred_check_branch
      %17 = sbr.rel (0) target = $region5
    $region4: #{tpu_custom_call.1} parent=1 // pred_region
      _
    $region5: #{tpu_custom_call.1} parent=1 // pred_fallthru
      _
    // Predicated region
    $region6: #{tpu_custom_call.1} parent=1 // pred_check
      _
    $region7: #{tpu_custom_call.1} parent=1 // pred_check_branch
      %19 = sbr.rel (0) target = $region9
    $region8: #{tpu_custom_call.1} parent=1 // pred_region
      _
    $region9: #{tpu_custom_call.1} parent=1 // pred_fallthru
      _
    // Predicated region
    $region10: #{tpu_custom_call.1} parent=1 // pred_check
      _
    $region11: #{tpu_custom_call.1} parent=1 // pred_check_branch
      %21 = sbr.rel (0) target = $region13
    $region12: #{tpu_custom_call.1} parent=1 // pred_region
      _
    $region13: #{tpu_custom_call.1} parent=1 // pred_fallthru
      _
    // Predicated region
    $region14: #{tpu_custom_call.1} parent=1 // pred_check
      _
    $region15: #{tpu_custom_call.1} parent=1 // pred_check_branch
      %23 = sbr.rel (0) target = $region17
    $region16: #{tpu_custom_call.1} parent=1 // pred_region
      _
    $region17: #{tpu_custom_call.1} parent=1 // pred_fallthru
      _
    // Predicated region
    $region18: #{tpu_custom_call.1} parent=1 // pred_check
      _
    $region19: #{tpu_custom_call.1} parent=1 // pred_check_branch
      %25 = sbr.rel (0) target = $region21
    $region20: #{tpu_custom_call.1} parent=1 // pred_region
      _
    $region21: #{tpu_custom_call.1} parent=1 // pred_fallthru
      _
    // Predicated region
    $region22: #{tpu_custom_call.1} parent=1 // pred_check
      _
    $region23: #{tpu_custom_call.1} parent=1 // pred_check_branch
      %27 = sbr.rel (0) target = $region25
    $region24: #{tpu_custom_call.1} parent=1 // pred_region
      _
    $region25: #{tpu_custom_call.1} parent=1 // pred_fallthru
      _
    // Predicated region
    $region26: #{tpu_custom_call.1} parent=1 // pred_check
      _
    $region27: #{tpu_custom_call.1} parent=1 // pred_check_branch
      %29 = sbr.rel (0) target = $region29
    $region28: #{tpu_custom_call.1} parent=1 // pred_region
      _
    $region29: #{tpu_custom_call.1} parent=1 // pred_fallthru
      _
    // Predicated region
    $region30: #{tpu_custom_call.1} parent=1 // pred_check
      _
    $region31: #{tpu_custom_call.1} parent=1 // pred_check_branch
      %31 = sbr.rel (0) target = $region33
    $region32: #{tpu_custom_call.1} parent=1 // pred_region
      _
    $region33: #{tpu_custom_call.1} parent=1 // pred_fallthru
      _
    // Predicated region
    $region34: #{tpu_custom_call.1} parent=1 // pred_check
      _
    $region35: #{tpu_custom_call.1} parent=1 // pred_check_branch
      %33 = sbr.rel (0) target = $region37
    $region36: #{tpu_custom_call.1} parent=1 // pred_region
      _
    $region37: #{tpu_custom_call.1} parent=1 // pred_fallthru
      _
    // Predicated region
    $region38: #{tpu_custom_call.1} parent=1 // pred_check
      _
    $region39: #{tpu_custom_call.1} parent=1 // pred_check_branch
      %35 = sbr.rel (0) target = $region41
    $region40: #{tpu_custom_call.1} parent=1 // pred_region
      _
    $region41: #{tpu_custom_call.1} parent=1 // pred_fallthru
      _
    %v36 = vld [vmem:[%s0] sm:$0xff]
    %v37 = vld [vmem:[%s0 + $0x8] sm:$0xff]
    %v38 = vld [vmem:[%s0 + $0x10] sm:$0xff]
    %v39 = vld [vmem:[%s0 + $0x18] sm:$0xff]
    %v40 = vld [vmem:[%s2] sm:$0x1]
    %v41 = vld [vmem:[%s3] sm:$0x1]
    %vm42 = vcmask 261120
    %v43 = vsel %vm42, %v36, 0.0
    %44 = vadd.xlane.f32.xlu0 %v43
    %v45 = vpop.xlane.xlu0 %44
    %v46 = vsel %vm42, %v37, 0.0
    %47 = vadd.xlane.f32.xlu0 %v46
    %v48 = vpop.xlane.xlu0 %47
    %v49 = vsel %vm42, %v38, 0.0
    %50 = vadd.xlane.f32.xlu0 %v49
    %v51 = vpop.xlane.xlu0 %50
    %v52 = vsel %vm42, %v39, 0.0
    %53 = vadd.xlane.f32.xlu0 %v52
    %v54 = vpop.xlane.xlu0 %53
    %v55 = vrcp.pop 32.0
    %v56 = vmul.f32 32.0, %v55
    %v57 = vsub.f32 1.0, %v56
    %v58 = vmul.f32 %v55, %v57
    %v59 = vadd.f32 %v55, %v58
    %vm60 = vweird.f32 %v55
    %v61 = vsel %vm60, %v55, %v59
    %v62 = vmul.f32 %v45, %v61
    %v63 = vmul.f32 %v48, %v61
    %v64 = vmul.f32 %v51, %v61
    %v65 = vmul.f32 %v54, %v61
    %v66 = vsub.f32 %v36, %v62
    %v67 = vsub.f32 %v37, %v63
    %v68 = vsub.f32 %v38, %v64
    %v69 = vsub.f32 %v39, %v65
    %v70 = vmul.f32 %v66, %v66
    %v71 = vmul.f32 %v67, %v67
    %v72 = vmul.f32 %v68, %v68
    %v73 = vmul.f32 %v69, %v69
    %v74 = vsel %vm42, %v70, 0.0
    %75 = vadd.xlane.f32.xlu0 %v74
    %v76 = vpop.xlane.xlu0 %75
    %v77 = vsel %vm42, %v71, 0.0
    %78 = vadd.xlane.f32.xlu0 %v77
    %v79 = vpop.xlane.xlu0 %78
    %v80 = vsel %vm42, %v72, 0.0
    %81 = vadd.xlane.f32.xlu0 %v80
    %v82 = vpop.xlane.xlu0 %81
    %v83 = vsel %vm42, %v73, 0.0
    %84 = vadd.xlane.f32.xlu0 %v83
    %v85 = vpop.xlane.xlu0 %84
    %v86 = vmul.f32 %v76, %v61
    %v87 = vmul.f32 %v79, %v61
    %v88 = vmul.f32 %v82, %v61
    %v89 = vmul.f32 %v85, %v61
    %v90 = vadd.f32 %v86, 1e-05
    %v91 = vadd.f32 %v87, 1e-05
    %v92 = vadd.f32 %v88, 1e-05
    %v93 = vadd.f32 %v89, 1e-05
    %v94 = vrsqrt.pop %v90
    %v95 = vmul.f32 %v94, %v90
    %v96 = vmul.f32 %v95, %v94
    %v97 = vmul.f32 0.5, %v96
    %v98 = vsub.f32 1.5, %v97
    %v99 = vmul.f32 %v94, %v98
    %vm100 = vweird.f32 %v90
    %vm101 = vweird.f32 %v94
    %vm102 = vmor %vm100, %vm101
    %v103 = vsel %vm102, %v94, %v99
    %v104 = vrsqrt.pop %v91
    %v105 = vmul.f32 %v104, %v91
    %v106 = vmul.f32 %v105, %v104
    %v107 = vmul.f32 0.5, %v106
    %v108 = vsub.f32 1.5, %v107
    %v109 = vmul.f32 %v104, %v108
    %vm110 = vweird.f32 %v91
    %vm111 = vweird.f32 %v104
    %vm112 = vmor %vm110, %vm111
    %v113 = vsel %vm112, %v104, %v109
    %v114 = vrsqrt.pop %v92
    %v115 = vmul.f32 %v114, %v92
    %v116 = vmul.f32 %v115, %v114
    %v117 = vmul.f32 0.5, %v116
    %v118 = vsub.f32 1.5, %v117
    %v119 = vmul.f32 %v114, %v118
    %vm120 = vweird.f32 %v92
    %vm121 = vweird.f32 %v114
    %vm122 = vmor %vm120, %vm121
    %v123 = vsel %vm122, %v114, %v119
    %v124 = vrsqrt.pop %v93
    %v125 = vmul.f32 %v124, %v93
    %v126 = vmul.f32 %v125, %v124
    %v127 = vmul.f32 0.5, %v126
    %v128 = vsub.f32 1.5, %v127
    %v129 = vmul.f32 %v124, %v128
    %vm130 = vweird.f32 %v93
    %vm131 = vweird.f32 %v124
    %vm132 = vmor %vm130, %vm131
    %v133 = vsel %vm132, %v124, %v129
    %v134 = vmul.f32 %v66, %v103
    %v135 = vmul.f32 %v67, %v113
    %v136 = vmul.f32 %v68, %v123
    %v137 = vmul.f32 %v69, %v133
    %v139 = vperm.slane %v40, 0
    %v141 = vmul.f32 %v134, %v139
    %v142 = vmul.f32 %v135, %v139
    %v143 = vmul.f32 %v136, %v139
    %v144 = vmul.f32 %v137, %v139
    %v146 = vperm.slane %v41, 0
    %v148 = vadd.f32 %v141, %v146
    %v149 = vadd.f32 %v142, %v146
    %v150 = vadd.f32 %v143, %v146
    %v151 = vadd.f32 %v144, %v146
    %v152 = vld [vmem:[%s1] sm:$0xff]
    %v153 = vld [vmem:[%s1 + $0x8] sm:$0xff]
    %v154 = vld [vmem:[%s4] sm:$0x1]
    %v155 = vld [vmem:[%s5] sm:$0x1]
    %v156 = vsel %vm42, %v152, 0.0
    %157 = vadd.xlane.f32.xlu0 %v156
    %v158 = vpop.xlane.xlu0 %157
    %v159 = vsel %vm42, %v153, 0.0
    %160 = vadd.xlane.f32.xlu0 %v159
    %v161 = vpop.xlane.xlu0 %160
    %v162 = vmul.f32 %v158, %v61
    %v163 = vmul.f32 %v161, %v61
    %v164 = vsub.f32 %v152, %v162
    %v165 = vsub.f32 %v153, %v163
    %v166 = vmul.f32 %v164, %v164
    %v167 = vmul.f32 %v165, %v165
    %v168 = vsel %vm42, %v166, 0.0
    %169 = vadd.xlane.f32.xlu0 %v168
    %v170 = vpop.xlane.xlu0 %169
    %v171 = vsel %vm42, %v167, 0.0
    %172 = vadd.xlane.f32.xlu0 %v171
    %v173 = vpop.xlane.xlu0 %172
    %v174 = vmul.f32 %v170, %v61
    %v175 = vmul.f32 %v173, %v61
    %v176 = vadd.f32 %v174, 1e-05
    %v177 = vadd.f32 %v175, 1e-05
    %v178 = vrsqrt.pop %v176
    %v179 = vmul.f32 %v178, %v176
    %v180 = vmul.f32 %v179, %v178
    %v181 = vmul.f32 0.5, %v180
    %v182 = vsub.f32 1.5, %v181
    %v183 = vmul.f32 %v178, %v182
    %vm184 = vweird.f32 %v176
    %vm185 = vweird.f32 %v178
    %vm186 = vmor %vm184, %vm185
    %v187 = vsel %vm186, %v178, %v183
    %v188 = vrsqrt.pop %v177
    %v189 = vmul.f32 %v188, %v177
    %v190 = vmul.f32 %v189, %v188
    %v191 = vmul.f32 0.5, %v190
    %v192 = vsub.f32 1.5, %v191
    %v193 = vmul.f32 %v188, %v192
    %vm194 = vweird.f32 %v177
    %vm195 = vweird.f32 %v188
    %vm196 = vmor %vm194, %vm195
    %v197 = vsel %vm196, %v188, %v193
    %v198 = vmul.f32 %v164, %v187
    %v199 = vmul.f32 %v165, %v197
    %v201 = vperm.slane %v154, 0
    %v203 = vmul.f32 %v198, %v201
    %v204 = vmul.f32 %v199, %v201
    %v206 = vperm.slane %v155, 0
    %v208 = vadd.f32 %v203, %v206
    %v209 = vadd.f32 %v204, %v206
    %210 = vst.msk [vmem:[#allocation2] sm:$0xff] %vm42, %v148
    %211 = vst.msk [vmem:[#allocation2 + $0x8] sm:$0xff] %vm42, %v149
    %212 = vst.msk [vmem:[#allocation2 + $0x10] sm:$0xff] %vm42, %v208
    %213 = vst.msk [vmem:[#allocation2 + $0x18] sm:$0xff] %vm42, %v150
    %214 = vst.msk [vmem:[#allocation2 + $0x20] sm:$0xff] %vm42, %v151
    %215 = vst.msk [vmem:[#allocation2 + $0x28] sm:$0xff] %vm42, %v209
    %v216 = vld [vmem:[#allocation2] sm:$0xff]
    %v217 = vld [vmem:[#allocation2 + $0x8] sm:$0xff]
    %v218 = vld [vmem:[#allocation2 + $0x10] sm:$0xff]
    %v219 = vld [vmem:[#allocation2 + $0x18] sm:$0xff]
    %v220 = vld [vmem:[#allocation2 + $0x20] sm:$0xff]
    %v221 = vld [vmem:[#allocation2 + $0x28] sm:$0xff]
    %v222 = vld [vmem:[%s6] sm:$0xff]
    %v223 = vld [vmem:[%s6 + $0x8] sm:$0xff]
    %v224 = vld [vmem:[%s6 + $0x10] sm:$0xff]
    %v225 = vld [vmem:[%s6 + $0x18] sm:$0xff]
    %v226 = vld [vmem:[%s6 + $0x20] sm:$0xff]
    %v227 = vld [vmem:[%s6 + $0x28] sm:$0xff]
    %v228 = vld [vmem:[%s6 + $0x30] sm:$0xff]
    %v229 = vld [vmem:[%s6 + $0x38] sm:$0xff]
    %v230 = vld [vmem:[%s6 + $0x40] sm:$0xff]
    %v231 = vld [vmem:[%s6 + $0x48] sm:$0xff]
    %v232 = vld [vmem:[%s6 + $0x50] sm:$0xff]
    %v233 = vld [vmem:[%s6 + $0x58] sm:$0xff]
    %v234 = vld [vmem:[%s6 + $0x60] sm:$0xff]
    %v235 = vld [vmem:[%s6 + $0x68] sm:$0xff]
    %v236 = vld [vmem:[%s6 + $0x70] sm:$0xff]
    %v237 = vld [vmem:[%s6 + $0x78] sm:$0xff]
    %v239 = vsel %vm42, %v208, 0
    %v242 = vsel %vm42, %v209, 0
    %244 = vmatpush.msra.mxu0 0.0
    %245 = vmatpush.msra.mxu0 0.0
    %246 = vmatpush.msra.mxu0 0.0
    %247 = vmatpush.msra.mxu0 0.0
    %248 = vmatpush.msra.mxu0 0.0
    %249 = vmatpush.msra.mxu0 0.0
    %250 = vmatpush.msra.mxu0 0.0
    %251 = vmatpush.msra.mxu0 0.0
    %252 = vmatpush.msra.mxu0 0.0
    %253 = vmatpush.msra.mxu0 0.0
    %254 = vmatpush.msra.mxu0 0.0
    %255 = vmatpush.msra.mxu0 0.0
    %256 = vmatpush.msra.mxu0 %v225
    %257 = vmatpush.msra.mxu0 %v224
    %258 = vmatpush.msra.mxu0 %v223
    %259 = vmatpush.msra.mxu0 %v222
    %260 = vmatmul.f32.gmra.mxu0 %v239
    %v261 = vpop.f32.mrf.mxu0
    %v262 = vadd.f32 0.0, %v261
    %263 = vmatmul.f32.gmra.mxu0 %v242
    %v264 = vpop.f32.mrf.mxu0
    %v265 = vadd.f32 0.0, %v264
    %266 = vdwg.mxu0
    %267 = vmatpush.msra.mxu0 0.0
    %268 = vmatpush.msra.mxu0 0.0
    %269 = vmatpush.msra.mxu0 0.0
    %270 = vmatpush.msra.mxu0 0.0
    %271 = vmatpush.msra.mxu0 0.0
    %272 = vmatpush.msra.mxu0 0.0
    %273 = vmatpush.msra.mxu0 0.0
    %274 = vmatpush.msra.mxu0 0.0
    %275 = vmatpush.msra.mxu0 0.0
    %276 = vmatpush.msra.mxu0 0.0
    %277 = vmatpush.msra.mxu0 0.0
    %278 = vmatpush.msra.mxu0 0.0
    %279 = vmatpush.msra.mxu0 %v229
    %280 = vmatpush.msra.mxu0 %v228
    %281 = vmatpush.msra.mxu0 %v227
    %282 = vmatpush.msra.mxu0 %v226
    %283 = vmatmul.f32.gmra.mxu0 %v239
    %v284 = vpop.f32.mrf.mxu0
    %v285 = vadd.f32 0.0, %v284
    %286 = vmatmul.f32.gmra.mxu0 %v242
    %v287 = vpop.f32.mrf.mxu0
    %v288 = vadd.f32 0.0, %v287
    %289 = vdwg.mxu0
    %290 = vmatpush.msra.mxu0 0.0
    %291 = vmatpush.msra.mxu0 0.0
    %292 = vmatpush.msra.mxu0 0.0
    %293 = vmatpush.msra.mxu0 0.0
    %294 = vmatpush.msra.mxu0 0.0
    %295 = vmatpush.msra.mxu0 0.0
    %296 = vmatpush.msra.mxu0 0.0
    %297 = vmatpush.msra.mxu0 0.0
    %298 = vmatpush.msra.mxu0 0.0
    %299 = vmatpush.msra.mxu0 0.0
    %300 = vmatpush.msra.mxu0 0.0
    %301 = vmatpush.msra.mxu0 0.0
    %302 = vmatpush.msra.mxu0 %v233
    %303 = vmatpush.msra.mxu0 %v232
    %304 = vmatpush.msra.mxu0 %v231
    %305 = vmatpush.msra.mxu0 %v230
    %306 = vmatmul.f32.gmra.mxu0 %v239
    %v307 = vpop.f32.mrf.mxu0
    %v308 = vadd.f32 0.0, %v307
    %309 = vmatmul.f32.gmra.mxu0 %v242
    %v310 = vpop.f32.mrf.mxu0
    %v311 = vadd.f32 0.0, %v310
    %312 = vdwg.mxu0
    %313 = vmatpush.msra.mxu0 0.0
    %314 = vmatpush.msra.mxu0 0.0
    %315 = vmatpush.msra.mxu0 0.0
    %316 = vmatpush.msra.mxu0 0.0
    %317 = vmatpush.msra.mxu0 0.0
    %318 = vmatpush.msra.mxu0 0.0
    %319 = vmatpush.msra.mxu0 0.0
    %320 = vmatpush.msra.mxu0 0.0
    %321 = vmatpush.msra.mxu0 0.0
    %322 = vmatpush.msra.mxu0 0.0
    %323 = vmatpush.msra.mxu0 0.0
    %324 = vmatpush.msra.mxu0 0.0
    %325 = vmatpush.msra.mxu0 %v237
    %326 = vmatpush.msra.mxu0 %v236
    %327 = vmatpush.msra.mxu0 %v235
    %328 = vmatpush.msra.mxu0 %v234
    %329 = vmatmul.f32.gmra.mxu0 %v239
    %v330 = vpop.f32.mrf.mxu0
    %v331 = vadd.f32 0.0, %v330
    %332 = vmatmul.f32.gmra.mxu0 %v242
    %v333 = vpop.f32.mrf.mxu0
    %v334 = vadd.f32 0.0, %v333
    %335 = vdwg.mxu0
    %v336 = vld [vmem:[%s7] sm:$0xff]
    %v337 = vld [vmem:[%s7 + $0x8] sm:$0xff]
    %v338 = vld [vmem:[%s7 + $0x10] sm:$0xff]
    %v339 = vld [vmem:[%s7 + $0x18] sm:$0xff]
    %v340 = vld [vmem:[%s7 + $0x20] sm:$0xff]
    %v341 = vld [vmem:[%s7 + $0x28] sm:$0xff]
    %v342 = vld [vmem:[%s7 + $0x30] sm:$0xff]
    %v343 = vld [vmem:[%s7 + $0x38] sm:$0xff]
    %v344 = vld [vmem:[%s7 + $0x40] sm:$0xff]
    %v345 = vld [vmem:[%s7 + $0x48] sm:$0xff]
    %v346 = vld [vmem:[%s7 + $0x50] sm:$0xff]
    %v347 = vld [vmem:[%s7 + $0x58] sm:$0xff]
    %v348 = vld [vmem:[%s7 + $0x60] sm:$0xff]
    %v349 = vld [vmem:[%s7 + $0x68] sm:$0xff]
    %v350 = vld [vmem:[%s7 + $0x70] sm:$0xff]
    %v351 = vld [vmem:[%s7 + $0x78] sm:$0xff]
    %v353 = vsel %vm42, %v216, 0
    %v356 = vsel %vm42, %v217, 0
    %v359 = vsel %vm42, %v218, 0
    %v362 = vsel %vm42, %v219, 0
    %v365 = vsel %vm42, %v220, 0
    %v368 = vsel %vm42, %v221, 0
    %370 = vmatpush.msra.mxu0 0.0
    %371 = vmatpush.msra.mxu0 0.0
    %372 = vmatpush.msra.mxu0 0.0
    %373 = vmatpush.msra.mxu0 0.0
    %374 = vmatpush.msra.mxu0 0.0
    %375 = vmatpush.msra.mxu0 0.0
    %376 = vmatpush.msra.mxu0 0.0
    %377 = vmatpush.msra.mxu0 0.0
    %378 = vmatpush.msra.mxu0 0.0
    %379 = vmatpush.msra.mxu0 0.0
    %380 = vmatpush.msra.mxu0 0.0
    %381 = vmatpush.msra.mxu0 0.0
    %382 = vmatpush.msra.mxu0 %v339
    %383 = vmatpush.msra.mxu0 %v338
    %384 = vmatpush.msra.mxu0 %v337
    %385 = vmatpush.msra.mxu0 %v336
    %386 = vmatmul.f32.gmra.mxu0 %v353
    %v387 = vpop.f32.mrf.mxu0
    %v388 = vadd.f32 0.0, %v387
    %389 = vmatmul.f32.gmra.mxu0 %v356
    %v390 = vpop.f32.mrf.mxu0
    %v391 = vadd.f32 0.0, %v390
    %392 = vmatmul.f32.gmra.mxu0 %v359
    %v393 = vpop.f32.mrf.mxu0
    %v394 = vadd.f32 0.0, %v393
    %395 = vmatmul.f32.gmra.mxu0 %v362
    %v396 = vpop.f32.mrf.mxu0
    %v397 = vadd.f32 0.0, %v396
    %398 = vmatmul.f32.gmra.mxu0 %v365
    %v399 = vpop.f32.mrf.mxu0
    %v400 = vadd.f32 0.0, %v399
    %401 = vmatmul.f32.gmra.mxu0 %v368
    %v402 = vpop.f32.mrf.mxu0
    %v403 = vadd.f32 0.0, %v402
    %404 = vdwg.mxu0
    %405 = vmatpush.msra.mxu0 0.0
    %406 = vmatpush.msra.mxu0 0.0
    %407 = vmatpush.msra.mxu0 0.0
    %408 = vmatpush.msra.mxu0 0.0
    %409 = vmatpush.msra.mxu0 0.0
    %410 = vmatpush.msra.mxu0 0.0
    %411 = vmatpush.msra.mxu0 0.0
    %412 = vmatpush.msra.mxu0 0.0
    %413 = vmatpush.msra.mxu0 0.0
    %414 = vmatpush.msra.mxu0 0.0
    %415 = vmatpush.msra.mxu0 0.0
    %416 = vmatpush.msra.mxu0 0.0
    %417 = vmatpush.msra.mxu0 %v343
    %418 = vmatpush.msra.mxu0 %v342
    %419 = vmatpush.msra.mxu0 %v341
    %420 = vmatpush.msra.mxu0 %v340
    %421 = vmatmul.f32.gmra.mxu0 %v353
    %v422 = vpop.f32.mrf.mxu0
    %v423 = vadd.f32 0.0, %v422
    %424 = vmatmul.f32.gmra.mxu0 %v356
    %v425 = vpop.f32.mrf.mxu0
    %v426 = vadd.f32 0.0, %v425
    %427 = vmatmul.f32.gmra.mxu0 %v359
    %v428 = vpop.f32.mrf.mxu0
    %v429 = vadd.f32 0.0, %v428
    %430 = vmatmul.f32.gmra.mxu0 %v362
    %v431 = vpop.f32.mrf.mxu0
    %v432 = vadd.f32 0.0, %v431
    %433 = vmatmul.f32.gmra.mxu0 %v365
    %v434 = vpop.f32.mrf.mxu0
    %v435 = vadd.f32 0.0, %v434
    %436 = vmatmul.f32.gmra.mxu0 %v368
    %v437 = vpop.f32.mrf.mxu0
    %v438 = vadd.f32 0.0, %v437
    %439 = vdwg.mxu0
    %440 = vmatpush.msra.mxu0 0.0
    %441 = vmatpush.msra.mxu0 0.0
    %442 = vmatpush.msra.mxu0 0.0
    %443 = vmatpush.msra.mxu0 0.0
    %444 = vmatpush.msra.mxu0 0.0
    %445 = vmatpush.msra.mxu0 0.0
    %446 = vmatpush.msra.mxu0 0.0
    %447 = vmatpush.msra.mxu0 0.0
    %448 = vmatpush.msra.mxu0 0.0
    %449 = vmatpush.msra.mxu0 0.0
    %450 = vmatpush.msra.mxu0 0.0
    %451 = vmatpush.msra.mxu0 0.0
    %452 = vmatpush.msra.mxu0 %v347
    %453 = vmatpush.msra.mxu0 %v346
    %454 = vmatpush.msra.mxu0 %v345
    %455 = vmatpush.msra.mxu0 %v344
    %456 = vmatmul.f32.gmra.mxu0 %v353
    %v457 = vpop.f32.mrf.mxu0
    %v458 = vadd.f32 0.0, %v457
    %459 = vmatmul.f32.gmra.mxu0 %v356
    %v460 = vpop.f32.mrf.mxu0
    %v461 = vadd.f32 0.0, %v460
    %462 = vmatmul.f32.gmra.mxu0 %v359
    %v463 = vpop.f32.mrf.mxu0
    %v464 = vadd.f32 0.0, %v463
    %465 = vmatmul.f32.gmra.mxu0 %v362
    %v466 = vpop.f32.mrf.mxu0
    %v467 = vadd.f32 0.0, %v466
    %468 = vmatmul.f32.gmra.mxu0 %v365
    %v469 = vpop.f32.mrf.mxu0
    %v470 = vadd.f32 0.0, %v469
    %471 = vmatmul.f32.gmra.mxu0 %v368
    %v472 = vpop.f32.mrf.mxu0
    %v473 = vadd.f32 0.0, %v472
    %474 = vdwg.mxu0
    %475 = vmatpush.msra.mxu0 0.0
    %476 = vmatpush.msra.mxu0 0.0
    %477 = vmatpush.msra.mxu0 0.0
    %478 = vmatpush.msra.mxu0 0.0
    %479 = vmatpush.msra.mxu0 0.0
    %480 = vmatpush.msra.mxu0 0.0
    %481 = vmatpush.msra.mxu0 0.0
    %482 = vmatpush.msra.mxu0 0.0
    %483 = vmatpush.msra.mxu0 0.0
    %484 = vmatpush.msra.mxu0 0.0
    %485 = vmatpush.msra.mxu0 0.0
    %486 = vmatpush.msra.mxu0 0.0
    %487 = vmatpush.msra.mxu0 %v351
    %488 = vmatpush.msra.mxu0 %v350
    %489 = vmatpush.msra.mxu0 %v349
    %490 = vmatpush.msra.mxu0 %v348
    %491 = vmatmul.f32.gmra.mxu0 %v353
    %v492 = vpop.f32.mrf.mxu0
    %v493 = vadd.f32 0.0, %v492
    %494 = vmatmul.f32.gmra.mxu0 %v356
    %v495 = vpop.f32.mrf.mxu0
    %v496 = vadd.f32 0.0, %v495
    %497 = vmatmul.f32.gmra.mxu0 %v359
    %v498 = vpop.f32.mrf.mxu0
    %v499 = vadd.f32 0.0, %v498
    %500 = vmatmul.f32.gmra.mxu0 %v362
    %v501 = vpop.f32.mrf.mxu0
    %v502 = vadd.f32 0.0, %v501
    %503 = vmatmul.f32.gmra.mxu0 %v365
    %v504 = vpop.f32.mrf.mxu0
    %v505 = vadd.f32 0.0, %v504
    %506 = vmatmul.f32.gmra.mxu0 %v368
    %v507 = vpop.f32.mrf.mxu0
    %v508 = vadd.f32 0.0, %v507
    %509 = vdwg.mxu0
    %v510 = vld [vmem:[%s8] sm:$0xff]
    %v511 = vld [vmem:[%s8 + $0x8] sm:$0xff]
    %v512 = vld [vmem:[%s8 + $0x10] sm:$0xff]
    %v513 = vld [vmem:[%s8 + $0x18] sm:$0xff]
    %v514 = vld [vmem:[%s8 + $0x20] sm:$0xff]
    %v515 = vld [vmem:[%s8 + $0x28] sm:$0xff]
    %v516 = vld [vmem:[%s8 + $0x30] sm:$0xff]
    %v517 = vld [vmem:[%s8 + $0x38] sm:$0xff]
    %v518 = vld [vmem:[%s8 + $0x40] sm:$0xff]
    %v519 = vld [vmem:[%s8 + $0x48] sm:$0xff]
    %v520 = vld [vmem:[%s8 + $0x50] sm:$0xff]
    %v521 = vld [vmem:[%s8 + $0x58] sm:$0xff]
    %v522 = vld [vmem:[%s8 + $0x60] sm:$0xff]
    %v523 = vld [vmem:[%s8 + $0x68] sm:$0xff]
    %v524 = vld [vmem:[%s8 + $0x70] sm:$0xff]
    %v525 = vld [vmem:[%s8 + $0x78] sm:$0xff]
    %526 = vmatpush.msra.mxu0 0.0
    %527 = vmatpush.msra.mxu0 0.0
    %528 = vmatpush.msra.mxu0 0.0
    %529 = vmatpush.msra.mxu0 0.0
    %530 = vmatpush.msra.mxu0 0.0
    %531 = vmatpush.msra.mxu0 0.0
    %532 = vmatpush.msra.mxu0 0.0
    %533 = vmatpush.msra.mxu0 0.0
    %534 = vmatpush.msra.mxu0 0.0
    %535 = vmatpush.msra.mxu0 0.0
    %536 = vmatpush.msra.mxu0 0.0
    %537 = vmatpush.msra.mxu0 0.0
    %538 = vmatpush.msra.mxu0 %v513
    %539 = vmatpush.msra.mxu0 %v512
    %540 = vmatpush.msra.mxu0 %v511
    %541 = vmatpush.msra.mxu0 %v510
    %542 = vmatmul.f32.gmra.mxu0 %v353
    %v543 = vpop.f32.mrf.mxu0
    %v544 = vadd.f32 0.0, %v543
    %545 = vmatmul.f32.gmra.mxu0 %v356
    %v546 = vpop.f32.mrf.mxu0
    %v547 = vadd.f32 0.0, %v546
    %548 = vmatmul.f32.gmra.mxu0 %v359
    %v549 = vpop.f32.mrf.mxu0
    %v550 = vadd.f32 0.0, %v549
    %551 = vmatmul.f32.gmra.mxu0 %v362
    %v552 = vpop.f32.mrf.mxu0
    %v553 = vadd.f32 0.0, %v552
    %554 = vmatmul.f32.gmra.mxu0 %v365
    %v555 = vpop.f32.mrf.mxu0
    %v556 = vadd.f32 0.0, %v555
    %557 = vmatmul.f32.gmra.mxu0 %v368
    %v558 = vpop.f32.mrf.mxu0
    %v559 = vadd.f32 0.0, %v558
    %560 = vdwg.mxu0
    %561 = vmatpush.msra.mxu0 0.0
    %562 = vmatpush.msra.mxu0 0.0
    %563 = vmatpush.msra.mxu0 0.0
    %564 = vmatpush.msra.mxu0 0.0
    %565 = vmatpush.msra.mxu0 0.0
    %566 = vmatpush.msra.mxu0 0.0
    %567 = vmatpush.msra.mxu0 0.0
    %568 = vmatpush.msra.mxu0 0.0
    %569 = vmatpush.msra.mxu0 0.0
    %570 = vmatpush.msra.mxu0 0.0
    %571 = vmatpush.msra.mxu0 0.0
    %572 = vmatpush.msra.mxu0 0.0
    %573 = vmatpush.msra.mxu0 %v517
    %574 = vmatpush.msra.mxu0 %v516
    %575 = vmatpush.msra.mxu0 %v515
    %576 = vmatpush.msra.mxu0 %v514
    %577 = vmatmul.f32.gmra.mxu0 %v353
    %v578 = vpop.f32.mrf.mxu0
    %v579 = vadd.f32 0.0, %v578
    %580 = vmatmul.f32.gmra.mxu0 %v356
    %v581 = vpop.f32.mrf.mxu0
    %v582 = vadd.f32 0.0, %v581
    %583 = vmatmul.f32.gmra.mxu0 %v359
    %v584 = vpop.f32.mrf.mxu0
    %v585 = vadd.f32 0.0, %v584
    %586 = vmatmul.f32.gmra.mxu0 %v362
    %v587 = vpop.f32.mrf.mxu0
    %v588 = vadd.f32 0.0, %v587
    %589 = vmatmul.f32.gmra.mxu0 %v365
    %v590 = vpop.f32.mrf.mxu0
    %v591 = vadd.f32 0.0, %v590
    %592 = vmatmul.f32.gmra.mxu0 %v368
    %v593 = vpop.f32.mrf.mxu0
    %v594 = vadd.f32 0.0, %v593
    %595 = vdwg.mxu0
    %596 = vmatpush.msra.mxu0 0.0
    %597 = vmatpush.msra.mxu0 0.0
    %598 = vmatpush.msra.mxu0 0.0
    %599 = vmatpush.msra.mxu0 0.0
    %600 = vmatpush.msra.mxu0 0.0
    %601 = vmatpush.msra.mxu0 0.0
    %602 = vmatpush.msra.mxu0 0.0
    %603 = vmatpush.msra.mxu0 0.0
    %604 = vmatpush.msra.mxu0 0.0
    %605 = vmatpush.msra.mxu0 0.0
    %606 = vmatpush.msra.mxu0 0.0
    %607 = vmatpush.msra.mxu0 0.0
    %608 = vmatpush.msra.mxu0 %v521
    %609 = vmatpush.msra.mxu0 %v520
    %610 = vmatpush.msra.mxu0 %v519
    %611 = vmatpush.msra.mxu0 %v518
    %612 = vmatmul.f32.gmra.mxu0 %v353
    %v613 = vpop.f32.mrf.mxu0
    %v614 = vadd.f32 0.0, %v613
    %615 = vmatmul.f32.gmra.mxu0 %v356
    %v616 = vpop.f32.mrf.mxu0
    %v617 = vadd.f32 0.0, %v616
    %618 = vmatmul.f32.gmra.mxu0 %v359
    %v619 = vpop.f32.mrf.mxu0
    %v620 = vadd.f32 0.0, %v619
    %621 = vmatmul.f32.gmra.mxu0 %v362
    %v622 = vpop.f32.mrf.mxu0
    %v623 = vadd.f32 0.0, %v622
    %624 = vmatmul.f32.gmra.mxu0 %v365
    %v625 = vpop.f32.mrf.mxu0
    %v626 = vadd.f32 0.0, %v625
    %627 = vmatmul.f32.gmra.mxu0 %v368
    %v628 = vpop.f32.mrf.mxu0
    %v629 = vadd.f32 0.0, %v628
    %630 = vdwg.mxu0
    %631 = vmatpush.msra.mxu0 0.0
    %632 = vmatpush.msra.mxu0 0.0
    %633 = vmatpush.msra.mxu0 0.0
    %634 = vmatpush.msra.mxu0 0.0
    %635 = vmatpush.msra.mxu0 0.0
    %636 = vmatpush.msra.mxu0 0.0
    %637 = vmatpush.msra.mxu0 0.0
    %638 = vmatpush.msra.mxu0 0.0
    %639 = vmatpush.msra.mxu0 0.0
    %640 = vmatpush.msra.mxu0 0.0
    %641 = vmatpush.msra.mxu0 0.0
    %642 = vmatpush.msra.mxu0 0.0
    %643 = vmatpush.msra.mxu0 %v525
    %644 = vmatpush.msra.mxu0 %v524
    %645 = vmatpush.msra.mxu0 %v523
    %646 = vmatpush.msra.mxu0 %v522
    %647 = vmatmul.f32.gmra.mxu0 %v353
    %v648 = vpop.f32.mrf.mxu0
    %v649 = vadd.f32 0.0, %v648
    %650 = vmatmul.f32.gmra.mxu0 %v356
    %v651 = vpop.f32.mrf.mxu0
    %v652 = vadd.f32 0.0, %v651
    %653 = vmatmul.f32.gmra.mxu0 %v359
    %v654 = vpop.f32.mrf.mxu0
    %v655 = vadd.f32 0.0, %v654
    %656 = vmatmul.f32.gmra.mxu0 %v362
    %v657 = vpop.f32.mrf.mxu0
    %v658 = vadd.f32 0.0, %v657
    %659 = vmatmul.f32.gmra.mxu0 %v365
    %v660 = vpop.f32.mrf.mxu0
    %v661 = vadd.f32 0.0, %v660
    %662 = vmatmul.f32.gmra.mxu0 %v368
    %v663 = vpop.f32.mrf.mxu0
    %v664 = vadd.f32 0.0, %v663
    %665 = vdwg.mxu0
    %v666 = vmul.f32 %v262, 0.35355338
    %v667 = vmul.f32 %v265, 0.35355338
    %v668 = vmul.f32 %v285, 0.35355338
    %v669 = vmul.f32 %v288, 0.35355338
    %v670 = vmul.f32 %v308, 0.35355338
    %v671 = vmul.f32 %v311, 0.35355338
    %v672 = vmul.f32 %v331, 0.35355338
    %v673 = vmul.f32 %v334, 0.35355338
    %vm674 = vcmask 64512
    %v676 = vsel %vm674, %v666, 0
    %v679 = vsel %vm674, %v388, 0
    %v682 = vsel %vm674, %v391, 0
    %v685 = vsel %vm674, %v394, 0
    %687 = vmatpush.xpose.msra.mxu0 0.0
    %688 = vmatpush.xpose.msra.mxu0 0.0
    %689 = vmatpush.xpose.msra.mxu0 0.0
    %690 = vmatpush.xpose.msra.mxu0 0.0
    %691 = vmatpush.xpose.msra.mxu0 0.0
    %692 = vmatpush.xpose.msra.mxu0 0.0
    %693 = vmatpush.xpose.msra.mxu0 0.0
    %694 = vmatpush.xpose.msra.mxu0 0.0
    %695 = vmatpush.xpose.msra.mxu0 0.0
    %696 = vmatpush.xpose.msra.mxu0 0.0
    %697 = vmatpush.xpose.msra.mxu0 0.0
    %698 = vmatpush.xpose.msra.mxu0 0.0
    %699 = vmatpush.xpose.msra.mxu0 0.0
    %700 = vmatpush.xpose.msra.mxu0 %v685
    %701 = vmatpush.xpose.msra.mxu0 %v682
    %702 = vmatpush.xpose.msra.mxu0 %v679
    %703 = vmatmul.f32.gmra.mxu0 %v676
    %v704 = vpop.f32.mrf.mxu0
    %v705 = vadd.f32 0.0, %v704
    %706 = vdwg.mxu0
    %v708 = vsel %vm674, %v668, 0
    %v711 = vsel %vm674, %v423, 0
    %v714 = vsel %vm674, %v426, 0
    %v717 = vsel %vm674, %v429, 0
    %719 = vmatpush.xpose.msra.mxu0 0.0
    %720 = vmatpush.xpose.msra.mxu0 0.0
    %721 = vmatpush.xpose.msra.mxu0 0.0
    %722 = vmatpush.xpose.msra.mxu0 0.0
    %723 = vmatpush.xpose.msra.mxu0 0.0
    %724 = vmatpush.xpose.msra.mxu0 0.0
    %725 = vmatpush.xpose.msra.mxu0 0.0
    %726 = vmatpush.xpose.msra.mxu0 0.0
    %727 = vmatpush.xpose.msra.mxu0 0.0
    %728 = vmatpush.xpose.msra.mxu0 0.0
    %729 = vmatpush.xpose.msra.mxu0 0.0
    %730 = vmatpush.xpose.msra.mxu0 0.0
    %731 = vmatpush.xpose.msra.mxu0 0.0
    %732 = vmatpush.xpose.msra.mxu0 %v717
    %733 = vmatpush.xpose.msra.mxu0 %v714
    %734 = vmatpush.xpose.msra.mxu0 %v711
    %735 = vmatmul.f32.gmra.mxu0 %v708
    %v736 = vpop.f32.mrf.mxu0
    %v737 = vadd.f32 0.0, %v736
    %738 = vdwg.mxu0
    %v740 = vsel %vm674, %v670, 0
    %v743 = vsel %vm674, %v458, 0
    %v746 = vsel %vm674, %v461, 0
    %v749 = vsel %vm674, %v464, 0
    %751 = vmatpush.xpose.msra.mxu0 0.0
    %752 = vmatpush.xpose.msra.mxu0 0.0
    %753 = vmatpush.xpose.msra.mxu0 0.0
    %754 = vmatpush.xpose.msra.mxu0 0.0
    %755 = vmatpush.xpose.msra.mxu0 0.0
    %756 = vmatpush.xpose.msra.mxu0 0.0
    %757 = vmatpush.xpose.msra.mxu0 0.0
    %758 = vmatpush.xpose.msra.mxu0 0.0
    %759 = vmatpush.xpose.msra.mxu0 0.0
    %760 = vmatpush.xpose.msra.mxu0 0.0
    %761 = vmatpush.xpose.msra.mxu0 0.0
    %762 = vmatpush.xpose.msra.mxu0 0.0
    %763 = vmatpush.xpose.msra.mxu0 0.0
    %764 = vmatpush.xpose.msra.mxu0 %v749
    %765 = vmatpush.xpose.msra.mxu0 %v746
    %766 = vmatpush.xpose.msra.mxu0 %v743
    %767 = vmatmul.f32.gmra.mxu0 %v740
    %v768 = vpop.f32.mrf.mxu0
    %v769 = vadd.f32 0.0, %v768
    %770 = vdwg.mxu0
    %v772 = vsel %vm674, %v672, 0
    %v775 = vsel %vm674, %v493, 0
    %v778 = vsel %vm674, %v496, 0
    %v781 = vsel %vm674, %v499, 0
    %783 = vmatpush.xpose.msra.mxu0 0.0
    %784 = vmatpush.xpose.msra.mxu0 0.0
    %785 = vmatpush.xpose.msra.mxu0 0.0
    %786 = vmatpush.xpose.msra.mxu0 0.0
    %787 = vmatpush.xpose.msra.mxu0 0.0
    %788 = vmatpush.xpose.msra.mxu0 0.0
    %789 = vmatpush.xpose.msra.mxu0 0.0
    %790 = vmatpush.xpose.msra.mxu0 0.0
    %791 = vmatpush.xpose.msra.mxu0 0.0
    %792 = vmatpush.xpose.msra.mxu0 0.0
    %793 = vmatpush.xpose.msra.mxu0 0.0
    %794 = vmatpush.xpose.msra.mxu0 0.0
    %795 = vmatpush.xpose.msra.mxu0 0.0
    %796 = vmatpush.xpose.msra.mxu0 %v781
    %797 = vmatpush.xpose.msra.mxu0 %v778
    %798 = vmatpush.xpose.msra.mxu0 %v775
    %799 = vmatmul.f32.gmra.mxu0 %v772
    %v800 = vpop.f32.mrf.mxu0
    %v801 = vadd.f32 0.0, %v800
    %802 = vdwg.mxu0
    %vm803 = vcmask 195584
    %v804 = vsel %vm803, %v705, -inf
    %805 = vmax.xlane.f32.xlu0 %v804
    %v806 = vpop.xlane.xlu0 %805
    %v807 = vsel %vm803, %v737, -inf
    %808 = vmax.xlane.f32.xlu0 %v807
    %v809 = vpop.xlane.xlu0 %808
    %v810 = vsel %vm803, %v769, -inf
    %811 = vmax.xlane.f32.xlu0 %v810
    %v812 = vpop.xlane.xlu0 %811
    %v813 = vsel %vm803, %v801, -inf
    %814 = vmax.xlane.f32.xlu0 %v813
    %v815 = vpop.xlane.xlu0 %814
    %v816 = vsub.f32 %v705, %v806
    %v817 = vsub.f32 %v737, %v809
    %v818 = vsub.f32 %v769, %v812
    %v819 = vsub.f32 %v801, %v815
    %v820 = vmul.f32 %v816, 1.442695
    %v821 = vpow.pop %v820
    %v822 = vmul.f32 %v817, 1.442695
    %v823 = vpow.pop %v822
    %v824 = vmul.f32 %v818, 1.442695
    %v825 = vpow.pop %v824
    %v826 = vmul.f32 %v819, 1.442695
    %v827 = vpow.pop %v826
    %v828 = vsel %vm803, %v821, 0.0
    %829 = vadd.xlane.f32.xlu0 %v828
    %v830 = vpop.xlane.xlu0 %829
    %v831 = vsel %vm803, %v823, 0.0
    %832 = vadd.xlane.f32.xlu0 %v831
    %v833 = vpop.xlane.xlu0 %832
    %v834 = vsel %vm803, %v825, 0.0
    %835 = vadd.xlane.f32.xlu0 %v834
    %v836 = vpop.xlane.xlu0 %835
    %v837 = vsel %vm803, %v827, 0.0
    %838 = vadd.xlane.f32.xlu0 %v837
    %v839 = vpop.xlane.xlu0 %838
    %v840 = vrcp.pop %v830
    %v841 = vrcp.pop %v833
    %v842 = vrcp.pop %v836
    %v843 = vrcp.pop %v839
    %v844 = vmul.f32 %v821, %v840
    %v845 = vmul.f32 %v823, %v841
    %v846 = vmul.f32 %v825, %v842
    %v847 = vmul.f32 %v827, %v843
    %v849 = vsel %vm803, %v844, 0
    %851 = vmatpush.msra.mxu0 0.0
    %852 = vmatpush.msra.mxu0 0.0
    %853 = vmatpush.msra.mxu0 0.0
    %854 = vmatpush.msra.mxu0 0.0
    %855 = vmatpush.msra.mxu0 0.0
    %856 = vmatpush.msra.mxu0 0.0
    %857 = vmatpush.msra.mxu0 0.0
    %858 = vmatpush.msra.mxu0 0.0
    %859 = vmatpush.msra.mxu0 0.0
    %860 = vmatpush.msra.mxu0 0.0
    %861 = vmatpush.msra.mxu0 0.0
    %862 = vmatpush.msra.mxu0 0.0
    %863 = vmatpush.msra.mxu0 0.0
    %864 = vmatpush.msra.mxu0 %v550
    %865 = vmatpush.msra.mxu0 %v547
    %866 = vmatpush.msra.mxu0 %v544
    %867 = vmatmul.f32.gmra.mxu0 %v849
    %v868 = vpop.f32.mrf.mxu0
    %v869 = vadd.f32 0.0, %v868
    %870 = vdwg.mxu0
    %v872 = vsel %vm803, %v845, 0
    %874 = vmatpush.msra.mxu0 0.0
    %875 = vmatpush.msra.mxu0 0.0
    %876 = vmatpush.msra.mxu0 0.0
    %877 = vmatpush.msra.mxu0 0.0
    %878 = vmatpush.msra.mxu0 0.0
    %879 = vmatpush.msra.mxu0 0.0
    %880 = vmatpush.msra.mxu0 0.0
    %881 = vmatpush.msra.mxu0 0.0
    %882 = vmatpush.msra.mxu0 0.0
    %883 = vmatpush.msra.mxu0 0.0
    %884 = vmatpush.msra.mxu0 0.0
    %885 = vmatpush.msra.mxu0 0.0
    %886 = vmatpush.msra.mxu0 0.0
    %887 = vmatpush.msra.mxu0 %v585
    %888 = vmatpush.msra.mxu0 %v582
    %889 = vmatpush.msra.mxu0 %v579
    %890 = vmatmul.f32.gmra.mxu0 %v872
    %v891 = vpop.f32.mrf.mxu0
    %v892 = vadd.f32 0.0, %v891
    %893 = vdwg.mxu0
    %v895 = vsel %vm803, %v846, 0
    %897 = vmatpush.msra.mxu0 0.0
    %898 = vmatpush.msra.mxu0 0.0
    %899 = vmatpush.msra.mxu0 0.0
    %900 = vmatpush.msra.mxu0 0.0
    %901 = vmatpush.msra.mxu0 0.0
    %902 = vmatpush.msra.mxu0 0.0
    %903 = vmatpush.msra.mxu0 0.0
    %904 = vmatpush.msra.mxu0 0.0
    %905 = vmatpush.msra.mxu0 0.0
    %906 = vmatpush.msra.mxu0 0.0
    %907 = vmatpush.msra.mxu0 0.0
    %908 = vmatpush.msra.mxu0 0.0
    %909 = vmatpush.msra.mxu0 0.0
    %910 = vmatpush.msra.mxu0 %v620
    %911 = vmatpush.msra.mxu0 %v617
    %912 = vmatpush.msra.mxu0 %v614
    %913 = vmatmul.f32.gmra.mxu0 %v895
    %v914 = vpop.f32.mrf.mxu0
    %v915 = vadd.f32 0.0, %v914
    %916 = vdwg.mxu0
    %v918 = vsel %vm803, %v847, 0
    %920 = vmatpush.msra.mxu0 0.0
    %921 = vmatpush.msra.mxu0 0.0
    %922 = vmatpush.msra.mxu0 0.0
    %923 = vmatpush.msra.mxu0 0.0
    %924 = vmatpush.msra.mxu0 0.0
    %925 = vmatpush.msra.mxu0 0.0
    %926 = vmatpush.msra.mxu0 0.0
    %927 = vmatpush.msra.mxu0 0.0
    %928 = vmatpush.msra.mxu0 0.0
    %929 = vmatpush.msra.mxu0 0.0
    %930 = vmatpush.msra.mxu0 0.0
    %931 = vmatpush.msra.mxu0 0.0
    %932 = vmatpush.msra.mxu0 0.0
    %933 = vmatpush.msra.mxu0 %v655
    %934 = vmatpush.msra.mxu0 %v652
    %935 = vmatpush.msra.mxu0 %v649
    %936 = vmatmul.f32.gmra.mxu0 %v918
    %v937 = vpop.f32.mrf.mxu0
    %v938 = vadd.f32 0.0, %v937
    %939 = vdwg.mxu0
    %v940 = vld [vmem:[%s9] sm:$0xff]
    %v941 = vld [vmem:[%s9 + $0x8] sm:$0xff]
    %v942 = vld [vmem:[%s9 + $0x10] sm:$0xff]
    %v943 = vld [vmem:[%s9 + $0x18] sm:$0xff]
    %v945 = vsel %vm674, %v869, 0
    %947 = vmatpush.msra.mxu0 0.0
    %948 = vmatpush.msra.mxu0 0.0
    %949 = vmatpush.msra.mxu0 0.0
    %950 = vmatpush.msra.mxu0 0.0
    %951 = vmatpush.msra.mxu0 0.0
    %952 = vmatpush.msra.mxu0 0.0
    %953 = vmatpush.msra.mxu0 0.0
    %954 = vmatpush.msra.mxu0 0.0
    %955 = vmatpush.msra.mxu0 0.0
    %956 = vmatpush.msra.mxu0 0.0
    %957 = vmatpush.msra.mxu0 0.0
    %958 = vmatpush.msra.mxu0 0.0
    %959 = vmatpush.msra.mxu0 0.0
    %960 = vmatpush.msra.mxu0 0.0
    %961 = vmatpush.msra.mxu0 0.0
    %962 = vmatpush.msra.mxu0 %v940
    %963 = vmatmul.f32.gmra.mxu0 %v945
    %v964 = vpop.f32.mrf.mxu0
    %v965 = vadd.f32 0.0, %v964
    %966 = vdwg.mxu0
    %v968 = vsel %vm674, %v892, 0
    %970 = vmatpush.msra.mxu0 0.0
    %971 = vmatpush.msra.mxu0 0.0
    %972 = vmatpush.msra.mxu0 0.0
    %973 = vmatpush.msra.mxu0 0.0
    %974 = vmatpush.msra.mxu0 0.0
    %975 = vmatpush.msra.mxu0 0.0
    %976 = vmatpush.msra.mxu0 0.0
    %977 = vmatpush.msra.mxu0 0.0
    %978 = vmatpush.msra.mxu0 0.0
    %979 = vmatpush.msra.mxu0 0.0
    %980 = vmatpush.msra.mxu0 0.0
    %981 = vmatpush.msra.mxu0 0.0
    %982 = vmatpush.msra.mxu0 0.0
    %983 = vmatpush.msra.mxu0 0.0
    %984 = vmatpush.msra.mxu0 0.0
    %985 = vmatpush.msra.mxu0 %v941
    %986 = vmatmul.f32.gmra.mxu0 %v968
    %v987 = vpop.f32.mrf.mxu0
    %v988 = vadd.f32 0.0, %v987
    %989 = vdwg.mxu0
    %v991 = vsel %vm674, %v915, 0
    %993 = vmatpush.msra.mxu0 0.0
    %994 = vmatpush.msra.mxu0 0.0
    %995 = vmatpush.msra.mxu0 0.0
    %996 = vmatpush.msra.mxu0 0.0
    %997 = vmatpush.msra.mxu0 0.0
    %998 = vmatpush.msra.mxu0 0.0
    %999 = vmatpush.msra.mxu0 0.0
    %1000 = vmatpush.msra.mxu0 0.0
    %1001 = vmatpush.msra.mxu0 0.0
    %1002 = vmatpush.msra.mxu0 0.0
    %1003 = vmatpush.msra.mxu0 0.0
    %1004 = vmatpush.msra.mxu0 0.0
    %1005 = vmatpush.msra.mxu0 0.0
    %1006 = vmatpush.msra.mxu0 0.0
    %1007 = vmatpush.msra.mxu0 0.0
    %1008 = vmatpush.msra.mxu0 %v942
    %1009 = vmatmul.f32.gmra.mxu0 %v991
    %v1010 = vpop.f32.mrf.mxu0
    %v1011 = vadd.f32 0.0, %v1010
    %1012 = vdwg.mxu0
    %v1014 = vsel %vm674, %v938, 0
    %1016 = vmatpush.msra.mxu0 0.0
    %1017 = vmatpush.msra.mxu0 0.0
    %1018 = vmatpush.msra.mxu0 0.0
    %1019 = vmatpush.msra.mxu0 0.0
    %1020 = vmatpush.msra.mxu0 0.0
    %1021 = vmatpush.msra.mxu0 0.0
    %1022 = vmatpush.msra.mxu0 0.0
    %1023 = vmatpush.msra.mxu0 0.0
    %1024 = vmatpush.msra.mxu0 0.0
    %1025 = vmatpush.msra.mxu0 0.0
    %1026 = vmatpush.msra.mxu0 0.0
    %1027 = vmatpush.msra.mxu0 0.0
    %1028 = vmatpush.msra.mxu0 0.0
    %1029 = vmatpush.msra.mxu0 0.0
    %1030 = vmatpush.msra.mxu0 0.0
    %1031 = vmatpush.msra.mxu0 %v943
    %1032 = vmatmul.f32.gmra.mxu0 %v1014
    %v1033 = vpop.f32.mrf.mxu0
    %v1034 = vadd.f32 0.0, %v1033
    %1035 = vdwg.mxu0
    %v1036 = vsel %vm42, %v965, 0.0
    %v1037 = vsel %vm42, %v988, 0.0
    %v1038 = vadd.f32 %v1036, %v1037
    %v1039 = vsel %vm42, %v1011, 0.0
    %v1040 = vadd.f32 %v1038, %v1039
    %v1041 = vsel %vm42, %v1034, 0.0
    %v1042 = vadd.f32 %v1040, %v1041
    %1043 = vst.msk [vmem:[#allocation3] sm:$0xff] %vm42, %v1042
    %v1045 = vsel %vm674, %v667, 0
    %v1048 = vsel %vm674, %v397, 0
    %v1051 = vsel %vm674, %v400, 0
    %v1054 = vsel %vm674, %v403, 0
    %1056 = vmatpush.xpose.msra.mxu0 0.0
    %1057 = vmatpush.xpose.msra.mxu0 0.0
    %1058 = vmatpush.xpose.msra.mxu0 0.0
    %1059 = vmatpush.xpose.msra.mxu0 0.0
    %1060 = vmatpush.xpose.msra.mxu0 0.0
    %1061 = vmatpush.xpose.msra.mxu0 0.0
    %1062 = vmatpush.xpose.msra.mxu0 0.0
    %1063 = vmatpush.xpose.msra.mxu0 0.0
    %1064 = vmatpush.xpose.msra.mxu0 0.0
    %1065 = vmatpush.xpose.msra.mxu0 0.0
    %1066 = vmatpush.xpose.msra.mxu0 0.0
    %1067 = vmatpush.xpose.msra.mxu0 0.0
    %1068 = vmatpush.xpose.msra.mxu0 0.0
    %1069 = vmatpush.xpose.msra.mxu0 %v1054
    %1070 = vmatpush.xpose.msra.mxu0 %v1051
    %1071 = vmatpush.xpose.msra.mxu0 %v1048
    %1072 = vmatmul.f32.gmra.mxu0 %v1045
    %v1073 = vpop.f32.mrf.mxu0
    %v1074 = vadd.f32 0.0, %v1073
    %1075 = vdwg.mxu0
    %v1077 = vsel %vm674, %v669, 0
    %v1080 = vsel %vm674, %v432, 0
    %v1083 = vsel %vm674, %v435, 0
    %v1086 = vsel %vm674, %v438, 0
    %1088 = vmatpush.xpose.msra.mxu0 0.0
    %1089 = vmatpush.xpose.msra.mxu0 0.0
    %1090 = vmatpush.xpose.msra.mxu0 0.0
    %1091 = vmatpush.xpose.msra.mxu0 0.0
    %1092 = vmatpush.xpose.msra.mxu0 0.0
    %1093 = vmatpush.xpose.msra.mxu0 0.0
    %1094 = vmatpush.xpose.msra.mxu0 0.0
    %1095 = vmatpush.xpose.msra.mxu0 0.0
    %1096 = vmatpush.xpose.msra.mxu0 0.0
    %1097 = vmatpush.xpose.msra.mxu0 0.0
    %1098 = vmatpush.xpose.msra.mxu0 0.0
    %1099 = vmatpush.xpose.msra.mxu0 0.0
    %1100 = vmatpush.xpose.msra.mxu0 0.0
    %1101 = vmatpush.xpose.msra.mxu0 %v1086
    %1102 = vmatpush.xpose.msra.mxu0 %v1083
    %1103 = vmatpush.xpose.msra.mxu0 %v1080
    %1104 = vmatmul.f32.gmra.mxu0 %v1077
    %v1105 = vpop.f32.mrf.mxu0
    %v1106 = vadd.f32 0.0, %v1105
    %1107 = vdwg.mxu0
    %v1109 = vsel %vm674, %v671, 0
    %v1112 = vsel %vm674, %v467, 0
    %v1115 = vsel %vm674, %v470, 0
    %v1118 = vsel %vm674, %v473, 0
    %1120 = vmatpush.xpose.msra.mxu0 0.0
    %1121 = vmatpush.xpose.msra.mxu0 0.0
    %1122 = vmatpush.xpose.msra.mxu0 0.0
    %1123 = vmatpush.xpose.msra.mxu0 0.0
    %1124 = vmatpush.xpose.msra.mxu0 0.0
    %1125 = vmatpush.xpose.msra.mxu0 0.0
    %1126 = vmatpush.xpose.msra.mxu0 0.0
    %1127 = vmatpush.xpose.msra.mxu0 0.0
    %1128 = vmatpush.xpose.msra.mxu0 0.0
    %1129 = vmatpush.xpose.msra.mxu0 0.0
    %1130 = vmatpush.xpose.msra.mxu0 0.0
    %1131 = vmatpush.xpose.msra.mxu0 0.0
    %1132 = vmatpush.xpose.msra.mxu0 0.0
    %1133 = vmatpush.xpose.msra.mxu0 %v1118
    %1134 = vmatpush.xpose.msra.mxu0 %v1115
    %1135 = vmatpush.xpose.msra.mxu0 %v1112
    %1136 = vmatmul.f32.gmra.mxu0 %v1109
    %v1137 = vpop.f32.mrf.mxu0
    %v1138 = vadd.f32 0.0, %v1137
    %1139 = vdwg.mxu0
    %v1141 = vsel %vm674, %v673, 0
    %v1144 = vsel %vm674, %v502, 0
    %v1147 = vsel %vm674, %v505, 0
    %v1150 = vsel %vm674, %v508, 0
    %1152 = vmatpush.xpose.msra.mxu0 0.0
    %1153 = vmatpush.xpose.msra.mxu0 0.0
    %1154 = vmatpush.xpose.msra.mxu0 0.0
    %1155 = vmatpush.xpose.msra.mxu0 0.0
    %1156 = vmatpush.xpose.msra.mxu0 0.0
    %1157 = vmatpush.xpose.msra.mxu0 0.0
    %1158 = vmatpush.xpose.msra.mxu0 0.0
    %1159 = vmatpush.xpose.msra.mxu0 0.0
    %1160 = vmatpush.xpose.msra.mxu0 0.0
    %1161 = vmatpush.xpose.msra.mxu0 0.0
    %1162 = vmatpush.xpose.msra.mxu0 0.0
    %1163 = vmatpush.xpose.msra.mxu0 0.0
    %1164 = vmatpush.xpose.msra.mxu0 0.0
    %1165 = vmatpush.xpose.msra.mxu0 %v1150
    %1166 = vmatpush.xpose.msra.mxu0 %v1147
    %1167 = vmatpush.xpose.msra.mxu0 %v1144
    %1168 = vmatmul.f32.gmra.mxu0 %v1141
    %v1169 = vpop.f32.mrf.mxu0
    %v1170 = vadd.f32 0.0, %v1169
    %1171 = vdwg.mxu0
    %v1172 = vsel %vm803, %v1074, -inf
    %1173 = vmax.xlane.f32.xlu0 %v1172
    %v1174 = vpop.xlane.xlu0 %1173
    %v1175 = vsel %vm803, %v1106, -inf
    %1176 = vmax.xlane.f32.xlu0 %v1175
    %v1177 = vpop.xlane.xlu0 %1176
    %v1178 = vsel %vm803, %v1138, -inf
    %1179 = vmax.xlane.f32.xlu0 %v1178
    %v1180 = vpop.xlane.xlu0 %1179
    %v1181 = vsel %vm803, %v1170, -inf
    %1182 = vmax.xlane.f32.xlu0 %v1181
    %v1183 = vpop.xlane.xlu0 %1182
    %v1184 = vsub.f32 %v1074, %v1174
    %v1185 = vsub.f32 %v1106, %v1177
    %v1186 = vsub.f32 %v1138, %v1180
    %v1187 = vsub.f32 %v1170, %v1183
    %v1188 = vmul.f32 %v1184, 1.442695
    %v1189 = vpow.pop %v1188
    %v1190 = vmul.f32 %v1185, 1.442695
    %v1191 = vpow.pop %v1190
    %v1192 = vmul.f32 %v1186, 1.442695
    %v1193 = vpow.pop %v1192
    %v1194 = vmul.f32 %v1187, 1.442695
    %v1195 = vpow.pop %v1194
    %v1196 = vsel %vm803, %v1189, 0.0
    %1197 = vadd.xlane.f32.xlu0 %v1196
    %v1198 = vpop.xlane.xlu0 %1197
    %v1199 = vsel %vm803, %v1191, 0.0
    %1200 = vadd.xlane.f32.xlu0 %v1199
    %v1201 = vpop.xlane.xlu0 %1200
    %v1202 = vsel %vm803, %v1193, 0.0
    %1203 = vadd.xlane.f32.xlu0 %v1202
    %v1204 = vpop.xlane.xlu0 %1203
    %v1205 = vsel %vm803, %v1195, 0.0
    %1206 = vadd.xlane.f32.xlu0 %v1205
    %v1207 = vpop.xlane.xlu0 %1206
    %v1208 = vrcp.pop %v1198
    %v1209 = vrcp.pop %v1201
    %v1210 = vrcp.pop %v1204
    %v1211 = vrcp.pop %v1207
    %v1212 = vmul.f32 %v1189, %v1208
    %v1213 = vmul.f32 %v1191, %v1209
    %v1214 = vmul.f32 %v1193, %v1210
    %v1215 = vmul.f32 %v1195, %v1211
    %v1217 = vsel %vm803, %v1212, 0
    %1219 = vmatpush.msra.mxu0 0.0
    %1220 = vmatpush.msra.mxu0 0.0
    %1221 = vmatpush.msra.mxu0 0.0
    %1222 = vmatpush.msra.mxu0 0.0
    %1223 = vmatpush.msra.mxu0 0.0
    %1224 = vmatpush.msra.mxu0 0.0
    %1225 = vmatpush.msra.mxu0 0.0
    %1226 = vmatpush.msra.mxu0 0.0
    %1227 = vmatpush.msra.mxu0 0.0
    %1228 = vmatpush.msra.mxu0 0.0
    %1229 = vmatpush.msra.mxu0 0.0
    %1230 = vmatpush.msra.mxu0 0.0
    %1231 = vmatpush.msra.mxu0 0.0
    %1232 = vmatpush.msra.mxu0 %v559
    %1233 = vmatpush.msra.mxu0 %v556
    %1234 = vmatpush.msra.mxu0 %v553
    %1235 = vmatmul.f32.gmra.mxu0 %v1217
    %v1236 = vpop.f32.mrf.mxu0
    %v1237 = vadd.f32 0.0, %v1236
    %1238 = vdwg.mxu0
    %v1240 = vsel %vm803, %v1213, 0
    %1242 = vmatpush.msra.mxu0 0.0
    %1243 = vmatpush.msra.mxu0 0.0
    %1244 = vmatpush.msra.mxu0 0.0
    %1245 = vmatpush.msra.mxu0 0.0
    %1246 = vmatpush.msra.mxu0 0.0
    %1247 = vmatpush.msra.mxu0 0.0
    %1248 = vmatpush.msra.mxu0 0.0
    %1249 = vmatpush.msra.mxu0 0.0
    %1250 = vmatpush.msra.mxu0 0.0
    %1251 = vmatpush.msra.mxu0 0.0
    %1252 = vmatpush.msra.mxu0 0.0
    %1253 = vmatpush.msra.mxu0 0.0
    %1254 = vmatpush.msra.mxu0 0.0
    %1255 = vmatpush.msra.mxu0 %v594
    %1256 = vmatpush.msra.mxu0 %v591
    %1257 = vmatpush.msra.mxu0 %v588
    %1258 = vmatmul.f32.gmra.mxu0 %v1240
    %v1259 = vpop.f32.mrf.mxu0
    %v1260 = vadd.f32 0.0, %v1259
    %1261 = vdwg.mxu0
    %v1263 = vsel %vm803, %v1214, 0
    %1265 = vmatpush.msra.mxu0 0.0
    %1266 = vmatpush.msra.mxu0 0.0
    %1267 = vmatpush.msra.mxu0 0.0
    %1268 = vmatpush.msra.mxu0 0.0
    %1269 = vmatpush.msra.mxu0 0.0
    %1270 = vmatpush.msra.mxu0 0.0
    %1271 = vmatpush.msra.mxu0 0.0
    %1272 = vmatpush.msra.mxu0 0.0
    %1273 = vmatpush.msra.mxu0 0.0
    %1274 = vmatpush.msra.mxu0 0.0
    %1275 = vmatpush.msra.mxu0 0.0
    %1276 = vmatpush.msra.mxu0 0.0
    %1277 = vmatpush.msra.mxu0 0.0
    %1278 = vmatpush.msra.mxu0 %v629
    %1279 = vmatpush.msra.mxu0 %v626
    %1280 = vmatpush.msra.mxu0 %v623
    %1281 = vmatmul.f32.gmra.mxu0 %v1263
    %v1282 = vpop.f32.mrf.mxu0
    %v1283 = vadd.f32 0.0, %v1282
    %1284 = vdwg.mxu0
    %v1286 = vsel %vm803, %v1215, 0
    %1288 = vmatpush.msra.mxu0 0.0
    %1289 = vmatpush.msra.mxu0 0.0
    %1290 = vmatpush.msra.mxu0 0.0
    %1291 = vmatpush.msra.mxu0 0.0
    %1292 = vmatpush.msra.mxu0 0.0
    %1293 = vmatpush.msra.mxu0 0.0
    %1294 = vmatpush.msra.mxu0 0.0
    %1295 = vmatpush.msra.mxu0 0.0
    %1296 = vmatpush.msra.mxu0 0.0
    %1297 = vmatpush.msra.mxu0 0.0
    %1298 = vmatpush.msra.mxu0 0.0
    %1299 = vmatpush.msra.mxu0 0.0
    %1300 = vmatpush.msra.mxu0 0.0
    %1301 = vmatpush.msra.mxu0 %v664
    %1302 = vmatpush.msra.mxu0 %v661
    %1303 = vmatpush.msra.mxu0 %v658
    %1304 = vmatmul.f32.gmra.mxu0 %v1286
    %v1305 = vpop.f32.mrf.mxu0
    %v1306 = vadd.f32 0.0, %v1305
    %1307 = vdwg.mxu0
    %v1308 = vld [vmem:[%s9] sm:$0xff]
    %v1309 = vld [vmem:[%s9 + $0x8] sm:$0xff]
    %v1310 = vld [vmem:[%s9 + $0x10] sm:$0xff]
    %v1311 = vld [vmem:[%s9 + $0x18] sm:$0xff]
    %v1313 = vsel %vm674, %v1237, 0
    %1315 = vmatpush.msra.mxu0 0.0
    %1316 = vmatpush.msra.mxu0 0.0
    %1317 = vmatpush.msra.mxu0 0.0
    %1318 = vmatpush.msra.mxu0 0.0
    %1319 = vmatpush.msra.mxu0 0.0
    %1320 = vmatpush.msra.mxu0 0.0
    %1321 = vmatpush.msra.mxu0 0.0
    %1322 = vmatpush.msra.mxu0 0.0
    %1323 = vmatpush.msra.mxu0 0.0
    %1324 = vmatpush.msra.mxu0 0.0
    %1325 = vmatpush.msra.mxu0 0.0
    %1326 = vmatpush.msra.mxu0 0.0
    %1327 = vmatpush.msra.mxu0 0.0
    %1328 = vmatpush.msra.mxu0 0.0
    %1329 = vmatpush.msra.mxu0 0.0
    %1330 = vmatpush.msra.mxu0 %v1308
    %1331 = vmatmul.f32.gmra.mxu0 %v1313
    %v1332 = vpop.f32.mrf.mxu0
    %v1333 = vadd.f32 0.0, %v1332
    %1334 = vdwg.mxu0
    %v1336 = vsel %vm674, %v1260, 0
    %1338 = vmatpush.msra.mxu0 0.0
    %1339 = vmatpush.msra.mxu0 0.0
    %1340 = vmatpush.msra.mxu0 0.0
    %1341 = vmatpush.msra.mxu0 0.0
    %1342 = vmatpush.msra.mxu0 0.0
    %1343 = vmatpush.msra.mxu0 0.0
    %1344 = vmatpush.msra.mxu0 0.0
    %1345 = vmatpush.msra.mxu0 0.0
    %1346 = vmatpush.msra.mxu0 0.0
    %1347 = vmatpush.msra.mxu0 0.0
    %1348 = vmatpush.msra.mxu0 0.0
    %1349 = vmatpush.msra.mxu0 0.0
    %1350 = vmatpush.msra.mxu0 0.0
    %1351 = vmatpush.msra.mxu0 0.0
    %1352 = vmatpush.msra.mxu0 0.0
    %1353 = vmatpush.msra.mxu0 %v1309
    %1354 = vmatmul.f32.gmra.mxu0 %v1336
    %v1355 = vpop.f32.mrf.mxu0
    %v1356 = vadd.f32 0.0, %v1355
    %1357 = vdwg.mxu0
    %v1359 = vsel %vm674, %v1283, 0
    %1361 = vmatpush.msra.mxu0 0.0
    %1362 = vmatpush.msra.mxu0 0.0
    %1363 = vmatpush.msra.mxu0 0.0
    %1364 = vmatpush.msra.mxu0 0.0
    %1365 = vmatpush.msra.mxu0 0.0
    %1366 = vmatpush.msra.mxu0 0.0
    %1367 = vmatpush.msra.mxu0 0.0
    %1368 = vmatpush.msra.mxu0 0.0
    %1369 = vmatpush.msra.mxu0 0.0
    %1370 = vmatpush.msra.mxu0 0.0
    %1371 = vmatpush.msra.mxu0 0.0
    %1372 = vmatpush.msra.mxu0 0.0
    %1373 = vmatpush.msra.mxu0 0.0
    %1374 = vmatpush.msra.mxu0 0.0
    %1375 = vmatpush.msra.mxu0 0.0
    %1376 = vmatpush.msra.mxu0 %v1310
    %1377 = vmatmul.f32.gmra.mxu0 %v1359
    %v1378 = vpop.f32.mrf.mxu0
    %v1379 = vadd.f32 0.0, %v1378
    %1380 = vdwg.mxu0
    %v1382 = vsel %vm674, %v1306, 0
    %1384 = vmatpush.msra.mxu0 0.0
    %1385 = vmatpush.msra.mxu0 0.0
    %1386 = vmatpush.msra.mxu0 0.0
    %1387 = vmatpush.msra.mxu0 0.0
    %1388 = vmatpush.msra.mxu0 0.0
    %1389 = vmatpush.msra.mxu0 0.0
    %1390 = vmatpush.msra.mxu0 0.0
    %1391 = vmatpush.msra.mxu0 0.0
    %1392 = vmatpush.msra.mxu0 0.0
    %1393 = vmatpush.msra.mxu0 0.0
    %1394 = vmatpush.msra.mxu0 0.0
    %1395 = vmatpush.msra.mxu0 0.0
    %1396 = vmatpush.msra.mxu0 0.0
    %1397 = vmatpush.msra.mxu0 0.0
    %1398 = vmatpush.msra.mxu0 0.0
    %1399 = vmatpush.msra.mxu0 %v1311
    %1400 = vmatmul.f32.gmra.mxu0 %v1382
    %v1401 = vpop.f32.mrf.mxu0
    %v1402 = vadd.f32 0.0, %v1401
    %1403 = vdwg.mxu0
    %v1404 = vsel %vm42, %v1333, 0.0
    %v1405 = vsel %vm42, %v1356, 0.0
    %v1406 = vadd.f32 %v1404, %v1405
    %v1407 = vsel %vm42, %v1379, 0.0
    %v1408 = vadd.f32 %v1406, %v1407
    %v1409 = vsel %vm42, %v1402, 0.0
    %v1410 = vadd.f32 %v1408, %v1409
    %1411 = vst.msk [vmem:[#allocation3 + $0x8] sm:$0xff] %vm42, %v1410
    // Predicated region
    $region42: #{tpu_custom_call.1} parent=1 // pred_check
      _
    $region43: #{tpu_custom_call.1} parent=1 // pred_check_branch
      %1413 = sbr.rel (0) target = $region45
    $region44: #{tpu_custom_call.1} parent=1 // pred_region
      %1415 = vsyncadd [#allocation4], 0
      %s1416 = sshll.u32 [#allocation3], 4
      %s1417 = int_to_ptr.vmem [resolvable:$true] %s1416
      %s1418 = sshll.u32 %s10, 4
      %s1419 = int_to_ptr.hbm [resolvable:$true] %s1418
      %1424 = dma.vmem_to_hbm [thread:$0]  %s1417, 256, %s1419, [#allocation4], 128, 128, 8
    $region45: #{tpu_custom_call.1} parent=1 // pred_fallthru
      _
    // Predicated region
    $region46: #{tpu_custom_call.1} parent=1 // pred_check
      _
    $region47: #{tpu_custom_call.1} parent=1 // pred_check_branch
      %1426 = sbr.rel (0) target = $region49
    $region48: #{tpu_custom_call.1} parent=1 // pred_region
      %1428 = dma.done [#allocation4], 256
    $region49: #{tpu_custom_call.1} parent=1 // pred_fallthru
      _
    %1429 = vsyncpa [#allocation4], 1

</llo_original>
